<compile_context>
chip_gen: v7x
topology: tpu7x:2x2x1
jax: 0.10.0
libtpu: 0.0.40
codegen_flags: <defaults>
</compile_context>

<pallas_src>
import functools
import numpy as np
import jax
import jax.numpy as jnp
from jax import lax
from jax.experimental import pallas as pl
from jax.experimental.pallas import tpu as pltpu


def _fused_rot_conv_bn_relu_kernel(
        x_ref, w_hbm_ref, pf_ref, pft_ref, gamma_ref, beta_ref,   # inputs
        o_ref,                                                    # output (VMEM-resident)
        w_vmem, sum_ref, ssq_ref,                                 # scratch
        *, K, stride, Bt, NB, Ho, woc, eps, inv_count):
    # x_ref    : (Bt, Hp, Wp*Cin) bf16  -- Bt padded images, width*channels lane-flattened
    # w_hbm_ref: (K, Wp*Cin, Wo*Cout) bf16 in HBM (memory_space=pl.ANY)
    # pf_ref   : (Wo*Cout, F) f32  pools (wo, field, group-comp) lanes -> per-field sums
    # pft_ref  : (F, Wo*Cout) f32  broadcasts per-field scalars back to lanes
    # o_ref    : (B, Ho, Wo*Cout) f32, constant block index -> resident across the grid
    # w_vmem   : single-buffered VMEM copy of the Toeplitz weight (loaded once, step 0)
    # sum_ref, ssq_ref: (1, Wo*Cout) f32 running per-lane statistics
    nb = pl.program_id(0)

    @pl.when(nb == 0)
    def _init():
        # Weight is grid-invariant: DMA it once into a single VMEM copy instead of
        # letting the pipeline double-buffer it.
        pltpu.sync_copy(w_hbm_ref, w_vmem)
        sum_ref[...] = jnp.zeros_like(sum_ref)
        ssq_ref[...] = jnp.zeros_like(ssq_ref)

    # ---- convolution for this block: K lane-dense MXU matmuls with M = Bt*Ho ----
    x = x_ref[...]                                              # (Bt, Hp, Wp*Cin) bf16
    acc = jnp.zeros((Bt * Ho, woc), jnp.float32)
    for kh in range(K):                                         # static taps over height
        rows = x[:, kh: kh + (Ho - 1) * stride + 1: stride, :]  # (Bt, Ho, Wp*Cin)
        rows = rows.reshape(Bt * Ho, -1)                        # fold batch into M
        acc += jnp.dot(rows, w_vmem[kh], preferred_element_type=jnp.float32)
    # NOTE: the R2Conv bias is uniform within each regular field, so the train-mode
    # InnerBatchNorm below cancels it exactly -> no bias add here.
    # TODO(synk): if stride > 1 configs matter, pre-deinterleave rows in the wrapper
    # (strided sublane slices on packed bf16 are not free views).

    # ---- per-lane statistics (sublane reduce; off the MXU critical path) ----
    sum_ref[...] += jnp.sum(acc, axis=0, keepdims=True)
    ssq_ref[...] += jnp.sum(acc * acc, axis=0, keepdims=True)
    # TODO(synk): E[x^2]-E[x]^2 in f32 is fine at these magnitudes; switch to a
    # shifted / two-pass form if activations get large (data is VMEM-resident).

    if NB > 1:
        # Not the last block: stash raw conv output in the VMEM-resident output.
        @pl.when(nb < NB - 1)
        def _stash():
            o_ref[pl.ds(pl.multiple_of(nb * Bt, Bt), Bt)] = acc.reshape(Bt, Ho, woc)

    # ---- last block: per-field BN (train mode, biased var) + ReLU, vectorised ----
    @pl.when(nb == NB - 1)
    def _finalize():
        sum_f = jnp.dot(sum_ref[...], pf_ref[...], preferred_element_type=jnp.float32)
        ssq_f = jnp.dot(ssq_ref[...], pf_ref[...], preferred_element_type=jnp.float32)
        mean_f = sum_f * inv_count
        var_f = ssq_f * inv_count - mean_f * mean_f
        inv_f = lax.rsqrt(var_f + eps)
        scale_f = gamma_ref[...] * inv_f
        shift_f = beta_ref[...] - mean_f * scale_f
        # broadcast per-field scale/shift back to the lane-dense (1, Wo*Cout) layout
        scale = jnp.dot(scale_f, pft_ref[...], preferred_element_type=jnp.float32)
        shift = jnp.dot(shift_f, pft_ref[...], preferred_element_type=jnp.float32)
        # last block straight from the live accumulator (no extra VMEM round trip)
        o_ref[pl.ds((NB - 1) * Bt, Bt)] = jnp.maximum(
            acc * scale + shift, 0.0).reshape(Bt, Ho, woc)
        if NB > 1:
            # earlier blocks: ONE vectorised read-modify-write over the resident output
            body = o_ref[pl.ds(0, (NB - 1) * Bt)]
            o_ref[pl.ds(0, (NB - 1) * Bt)] = jnp.maximum(
                body * scale[None] + shift[None], 0.0)


def _pick_batch_block(B, Hp, wpc, Ho, woc):
    """Largest divisor Bt of B whose per-step working set fits a small VMEM budget.

    Larger Bt grows the matmul M dimension (amortises per-step overhead and MXU
    fill/drain); the budget keeps the double-buffered x block + f32 accumulator small
    enough to coexist with the resident output and the weight copy (v7x: 64 MiB VMEM).
    """
    budget = 8 << 20
    for bt in range(B, 0, -1):
        if B % bt:
            continue
        step_bytes = 2 * bt * Hp * wpc * 2 + bt * Ho * woc * 4
        if step_bytes <= budget:
            return bt
    return 1


def prepare_rot_conv_constants(w_oihw, bias_c, gamma_f, beta_f, *, N, stride, H, W):
    """Build the grid-invariant kernel operands ONCE at init time (numpy), not per call.

    bias_c is accepted for interface parity with R2Conv but intentionally unused: the
    conv bias is constant within each regular field, so train-mode InnerBatchNorm's
    mean subtraction cancels it exactly.
    TODO(synk): eval-mode BN (running stats) would need the bias and running mean/var
    folded into scale/shift instead.
    """
    del bias_c
    w_np = np.asarray(w_oihw, np.float32)
    Cout, Cin, K, _ = w_np.shape
    F = Cout // N
    P = (K - 1) // 2
    Hp, Wp = H + 2 * P, W + 2 * P
    Ho = (H + 2 * P - K) // stride + 1
    Wo = (W + 2 * P - K) // stride + 1

    # Width-unrolled (block-Toeplitz) conv weight: (K, Wp*Cin, Wo*Cout), bf16 for the MXU.
    # TODO(synk): at production widths / Cout >= 128 switch to a width-tiled or direct
    # NHWC conv formulation (this expansion is O(W^2) VMEM and ~W/K redundant MACs).
    w_hwio = np.transpose(w_np, (2, 3, 1, 0))                     # (K, K, Cin, Cout)
    w_big = np.zeros((K, Wp, Cin, Wo, Cout), np.float32)
    for kw in range(K):
        for wo in range(Wo):
            w_big[:, kw + stride * wo, :, wo, :] += w_hwio[:, kw]
    w_big = w_big.reshape(K, Wp * Cin, Wo * Cout)

    # Tiny field-pooling / broadcast matrices for the fused InnerBatchNorm.
    fid = (np.arange(Wo * Cout) % Cout) // N
    Pf = (fid[:, None] == np.arange(F)[None, :]).astype(np.float32)   # (Wo*Cout, F)

    return dict(
        w_big=jnp.asarray(w_big, jnp.bfloat16),
        Pf=jnp.asarray(Pf),
        PfT=jnp.asarray(Pf.T),
        gamma=jnp.asarray(np.asarray(gamma_f, np.float32).reshape(1, F)),
        beta=jnp.asarray(np.asarray(beta_f, np.float32).reshape(1, F)),
        meta=dict(K=K, stride=stride, P=P, Hp=Hp, Wp=Wp, Ho=Ho, Wo=Wo,
                  Cin=Cin, Cout=Cout, F=F, N=N),
    )


def rot_conv2d_forward(x_nchw, consts, *, eps=1e-5):
    meta = consts["meta"]
    K, stride, P = meta["K"], meta["stride"], meta["P"]
    Hp, Wp, Ho, Wo = meta["Hp"], meta["Wp"], meta["Ho"], meta["Wo"]
    Cin, Cout, F, N = meta["Cin"], meta["Cout"], meta["F"], meta["N"]
    B = x_nchw.shape[0]
    wpc, woc = Wp * Cin, Wo * Cout

    # --- glue: layout + padding; activations become lane-dense (B, Hp, Wp*Cin) bf16 ---
    x = jnp.transpose(x_nchw, (0, 2, 3, 1))
    x = jnp.pad(x, ((0, 0), (P, P), (P, P), (0, 0)))
    x = x.reshape(B, Hp, wpc).astype(jnp.bfloat16)

    Bt = _pick_batch_block(B, Hp, wpc, Ho, woc)
    NB = B // Bt
    inv_count = 1.0 / float(B * Ho * Wo * N)        # stats pooled over (B, H, W, group)

    # explicit VMEM budget (generous headroom, clamped to safe bounds)
    est_vmem = (2 * Bt * Hp * wpc * 2               # x blocks (bf16, double-buffered)
                + K * wpc * woc * 2                 # single weight copy (bf16 scratch)
                + B * Ho * woc * 4                  # resident f32 output
                + 6 * Bt * Ho * woc * 4             # f32 accumulator + temporaries
                + 8 * woc * 4 * (F + 2))            # pooling matrices / stats
    vmem_limit = int(min(max(4 * est_vmem, 16 << 20), 64 << 20))

    kernel = functools.partial(
        _fused_rot_conv_bn_relu_kernel,
        K=K, stride=stride, Bt=Bt, NB=NB, Ho=Ho, woc=woc,
        eps=eps, inv_count=inv_count)

    out3 = pl.pallas_call(
        kernel,
        out_shape=jax.ShapeDtypeStruct((B, Ho, woc), jnp.float32),
        grid_spec=pltpu.PrefetchScalarGridSpec(
            num_scalar_prefetch=0,
            grid=(NB,),
            in_specs=[
                pl.BlockSpec((Bt, Hp, wpc), lambda nb: (nb, 0, 0)),
                pl.BlockSpec(memory_space=pl.ANY),      # weight: copied once into scratch
                pl.BlockSpec((woc, F), lambda nb: (0, 0)),
                pl.BlockSpec((F, woc), lambda nb: (0, 0)),
                pl.BlockSpec((1, F), lambda nb: (0, 0)),
                pl.BlockSpec((1, F), lambda nb: (0, 0)),
            ],
            # constant output block index -> output stays resident in VMEM across the grid
            out_specs=pl.BlockSpec((B, Ho, woc), lambda nb: (0, 0, 0)),
            scratch_shapes=[
                pltpu.VMEM((K, wpc, woc), jnp.bfloat16),   # single-buffered weight copy
                pltpu.VMEM((1, woc), jnp.float32),         # running sum
                pltpu.VMEM((1, woc), jnp.float32),         # running sum of squares
            ],
        ),
        # batch-block axis carries the BN-stat reduction and the resident output.
        compiler_params=pltpu.CompilerParams(
            dimension_semantics=("arbitrary",),
            vmem_limit_bytes=vmem_limit),
    )(x, consts["w_big"], consts["Pf"], consts["PfT"], consts["gamma"], consts["beta"])

    out = out3.reshape(B, Ho, Wo, Cout)
    # TODO(synk): emit bf16 / keep NHWC end-to-end if the caller allows; f32 NCHW is kept
    # here for interface fidelity with the PyTorch module.
    return jnp.transpose(out, (0, 3, 1, 2))


if __name__ == "__main__":
    # rot_conv2d(input_channels=4, output_channels=4, kernel_size=3, stride=1, N=4,
    #            activation=True, deconv=False)
    N = 4                       # C_4 rotation group (exact 90-degree rotations)
    in_fields, out_fields = 4, 4
    K, stride = 3, 1
    B, H, W = 2, 16, 16
    Cin, Cout = in_fields * N, out_fields * N
    eps = 1e-5

    key = jax.random.PRNGKey(0)
    kx, kw, kb = jax.random.split(key, 3)
    x = jax.random.normal(kx, (B, Cin, H, W), jnp.float32)

    # Deterministic group-equivariant weight expansion for the regular repr of C_4:
    #   W[o*N+r, i*N+s] = rot90^r( psi[o, i, (s-r) mod N] )
    # TODO(synk): for N not in {1,2,4} escnn uses an interpolated steerable basis;
    # here N=4 so 90-degree rotations are exact.
    psi = np.array(jax.random.normal(kw, (out_fields, in_fields, N, K, K), jnp.float32))
    psi *= 1.0 / np.sqrt(K * K * Cin)
    W_np = np.zeros((Cout, Cin, K, K), np.float32)
    for o in range(out_fields):
        for i in range(in_fields):
            for r in range(N):
                for s in range(N):
                    W_np[o * N + r, i * N + s] = np.rot90(psi[o, i, (s - r) % N], k=r)
    w_oihw = jnp.asarray(W_np)

    # R2Conv bias is uniform within each regular field; InnerBatchNorm init: gamma=1, beta=0.
    bias_f = np.array(jax.random.normal(kb, (out_fields,), jnp.float32)) * 0.1
    bias_c = jnp.asarray(np.repeat(bias_f, N).astype(np.float32))
    gamma_f = jnp.ones((out_fields,), jnp.float32)
    beta_f = jnp.zeros((out_fields,), jnp.float32)

    # Constants are built ONCE here (init time), not inside the per-call forward.
    consts = prepare_rot_conv_constants(W_np, bias_c, gamma_f, beta_f,
                                        N=N, stride=stride, H=H, W=W)
    fwd = jax.jit(functools.partial(rot_conv2d_forward, consts=consts, eps=eps))
    out = jax.block_until_ready(fwd(x))

    # pure-JAX reference (conv in bf16 inputs / f32 accumulation to mirror the MXU path,
    # + bias + per-field train-mode BN + ReLU). The reference keeps the bias; the kernel
    # drops it, so matching also validates that BN cancels it.
    P = (K - 1) // 2
    x_nhwc = jnp.transpose(x, (0, 2, 3, 1)).astype(jnp.bfloat16)
    w_hwio = jnp.transpose(w_oihw, (2, 3, 1, 0)).astype(jnp.bfloat16)
    ref = lax.conv_general_dilated(x_nhwc, w_hwio, (stride, stride), [(P, P), (P, P)],
                                   dimension_numbers=('NHWC', 'HWIO', 'NHWC'),
                                   preferred_element_type=jnp.float32)
    ref = ref + bias_c[None, None, None, :]
    Ho, Wo = ref.shape[1], ref.shape[2]
    r5 = ref.reshape(B, Ho, Wo, out_fields, N)
    mean = r5.mean(axis=(0, 1, 2, 4), keepdims=True)
    var = r5.var(axis=(0, 1, 2, 4), keepdims=True)
    ref_out = jnp.maximum((r5 - mean) / jnp.sqrt(var + eps), 0.0).reshape(B, Ho, Wo, Cout)
    ref_out = jnp.transpose(ref_out, (0, 3, 1, 2))
    err = float(jnp.max(jnp.abs(out - ref_out)))
    assert err < 2e-3, f"mismatch vs reference: {err}"

    print("KERNEL_OK")
</pallas_src>

<mosaic_0001>
module attributes {stable_mosaic.version = 11 : i64} {
  func.func @_fused_rot_conv_bn_relu_kernel(%arg0: i32, %arg1: memref<2x18x288xbf16, #tpu.memory_space<vmem>>, %arg2: memref<3x288x256xbf16, #tpu.memory_space<any>>, %arg3: memref<256x4xf32, #tpu.memory_space<vmem>>, %arg4: memref<4x256xf32, #tpu.memory_space<vmem>>, %arg5: memref<1x4xf32, #tpu.memory_space<vmem>>, %arg6: memref<1x4xf32, #tpu.memory_space<vmem>>, %arg7: memref<2x16x256xf32, #tpu.memory_space<vmem>>, %arg8: memref<3x288x256xbf16, #tpu.memory_space<vmem>>, %arg9: memref<1x256xf32, #tpu.memory_space<vmem>>, %arg10: memref<1x256xf32, #tpu.memory_space<vmem>>) attributes {dimension_semantics = [#tpu.dimension_semantics<arbitrary>], iteration_bounds = array<i64: 1>, scalar_prefetch = 0 : i64, scratch_operands = 3 : i64, tpu.core_type = #tpu.core_type<tc>, window_params = [{transform_indices = @transform_0, window_bounds = array<i64: 2, 18, 288>}, {}, {pipeline_mode = #tpu.pipeline_mode<synchronous>, transform_indices = @transform_2, window_bounds = array<i64: 256, 4>}, {pipeline_mode = #tpu.pipeline_mode<synchronous>, transform_indices = @transform_3, window_bounds = array<i64: 4, 256>}, {pipeline_mode = #tpu.pipeline_mode<synchronous>, transform_indices = @transform_4, window_bounds = array<i64: 1, 4>}, {pipeline_mode = #tpu.pipeline_mode<synchronous>, transform_indices = @transform_5, window_bounds = array<i64: 1, 4>}, {pipeline_mode = #tpu.pipeline_mode<synchronous>, transform_indices = @transform_6, window_bounds = array<i64: 2, 16, 256>}]} {
    %c0_i32 = arith.constant 0 : i32
    %0 = arith.cmpi eq, %arg0, %c0_i32 : i32
    %1 = arith.extui %0 : i1 to i32
    %c0_i32_0 = arith.constant 0 : i32
    %2 = arith.cmpi ne, %1, %c0_i32_0 : i32
    scf.if %2 {
      "tpu.region"() ({
        %41 = tpu.sem_alloc : memref<!tpu.dma_semaphore, #tpu.memory_space<semaphore_mem>>
        tpu.enqueue_dma source(%arg2 : memref<3x288x256xbf16, #tpu.memory_space<any>>) target(%arg8 : memref<3x288x256xbf16, #tpu.memory_space<vmem>>) target_semaphore(%41 : memref<!tpu.dma_semaphore, #tpu.memory_space<semaphore_mem>>)
        tpu.wait_dma2 semaphore(%41 : memref<!tpu.dma_semaphore, #tpu.memory_space<semaphore_mem>>) src(%arg2 : memref<3x288x256xbf16, #tpu.memory_space<any>>) dst(%arg8 : memref<3x288x256xbf16, #tpu.memory_space<vmem>>)
        tpu.yield
      }) : () -> ()
      %cst_25 = arith.constant 0.000000e+00 : f32
      %37 = vector.broadcast %cst_25 : f32 to vector<1x256xf32>
      %c0_26 = arith.constant 0 : index
      %c0_27 = arith.constant 0 : index
      %38 = vector.load %arg9[%c0_26, %c0_27] : memref<1x256xf32, #tpu.memory_space<vmem>>, vector<1x256xf32>
      tpu.vector_store %arg9[%c0_26, %c0_27], %37 {strides = array<i32>} : memref<1x256xf32, #tpu.memory_space<vmem>>, vector<1x256xf32>,
      %cst_28 = arith.constant 0.000000e+00 : f32
      %39 = vector.broadcast %cst_28 : f32 to vector<1x256xf32>
      %c0_29 = arith.constant 0 : index
      %c0_30 = arith.constant 0 : index
      %40 = vector.load %arg10[%c0_29, %c0_30] : memref<1x256xf32, #tpu.memory_space<vmem>>, vector<1x256xf32>
      tpu.vector_store %arg10[%c0_29, %c0_30], %39 {strides = array<i32>} : memref<1x256xf32, #tpu.memory_space<vmem>>, vector<1x256xf32>,
    } else {
    }
    %c0 = arith.constant 0 : index
    %c0_1 = arith.constant 0 : index
    %c0_2 = arith.constant 0 : index
    %3 = vector.load %arg1[%c0, %c0_1, %c0_2] : memref<2x18x288xbf16, #tpu.memory_space<vmem>>, vector<2x18x288xbf16>
    %cst = arith.constant 0.000000e+00 : f32
    %4 = vector.broadcast %cst : f32 to vector<32x256xf32>
    %5 = vector.extract_strided_slice %3 {offsets = [0, 0, 0], sizes = [2, 16, 288], strides = [1, 1, 1]} : vector<2x18x288xbf16> to vector<2x16x288xbf16>
    %6 = vector.shape_cast %5 : vector<2x16x288xbf16> to vector<32x288xbf16>
    %c0_3 = arith.constant 0 : index
    %c0_4 = arith.constant 0 : index
    %c0_5 = arith.constant 0 : index
    %7 = vector.load %arg8[%c0_3, %c0_4, %c0_5] : memref<3x288x256xbf16, #tpu.memory_space<vmem>>, vector<1x288x256xbf16>
    %8 = vector.shape_cast %7 : vector<1x288x256xbf16> to vector<288x256xbf16>
    %cst_6 = arith.constant dense<0.000000e+00> : vector<32x256xf32>
    %9 = tpu.matmul %6, %8, %cst_6 {dimension_numbers = #tpu.dot_dimension_numbers<[1], [0], [0], [1], [0, 0, 1, 1], [], []>} : vector<32x288xbf16>, vector<288x256xbf16>, vector<32x256xf32> -> vector<32x256xf32>
    %10 = arith.addf %4, %9 : vector<32x256xf32>
    %11 = vector.extract_strided_slice %3 {offsets = [0, 1, 0], sizes = [2, 16, 288], strides = [1, 1, 1]} : vector<2x18x288xbf16> to vector<2x16x288xbf16>
    %12 = vector.shape_cast %11 : vector<2x16x288xbf16> to vector<32x288xbf16>
    %c1 = arith.constant 1 : index
    %c0_7 = arith.constant 0 : index
    %c0_8 = arith.constant 0 : index
    %13 = vector.load %arg8[%c1, %c0_7, %c0_8] : memref<3x288x256xbf16, #tpu.memory_space<vmem>>, vector<1x288x256xbf16>
    %14 = vector.shape_cast %13 : vector<1x288x256xbf16> to vector<288x256xbf16>
    %cst_9 = arith.constant dense<0.000000e+00> : vector<32x256xf32>
    %15 = tpu.matmul %12, %14, %cst_9 {dimension_numbers = #tpu.dot_dimension_numbers<[1], [0], [0], [1], [0, 0, 1, 1], [], []>} : vector<32x288xbf16>, vector<288x256xbf16>, vector<32x256xf32> -> vector<32x256xf32>
    %16 = arith.addf %10, %15 : vector<32x256xf32>
    %17 = vector.extract_strided_slice %3 {offsets = [0, 2, 0], sizes = [2, 16, 288], strides = [1, 1, 1]} : vector<2x18x288xbf16> to vector<2x16x288xbf16>
    %18 = vector.shape_cast %17 : vector<2x16x288xbf16> to vector<32x288xbf16>
    %c2 = arith.constant 2 : index
    %c0_10 = arith.constant 0 : index
    %c0_11 = arith.constant 0 : index
    %19 = vector.load %arg8[%c2, %c0_10, %c0_11] : memref<3x288x256xbf16, #tpu.memory_space<vmem>>, vector<1x288x256xbf16>
    %20 = vector.shape_cast %19 : vector<1x288x256xbf16> to vector<288x256xbf16>
    %cst_12 = arith.constant dense<0.000000e+00> : vector<32x256xf32>
    %21 = tpu.matmul %18, %20, %cst_12 {dimension_numbers = #tpu.dot_dimension_numbers<[1], [0], [0], [1], [0, 0, 1, 1], [], []>} : vector<32x288xbf16>, vector<288x256xbf16>, vector<32x256xf32> -> vector<32x256xf32>
    %22 = arith.addf %16, %21 : vector<32x256xf32>
    %c0_13 = arith.constant 0 : index
    %c0_14 = arith.constant 0 : index
    %23 = vector.load %arg9[%c0_13, %c0_14] : memref<1x256xf32, #tpu.memory_space<vmem>>, vector<1x256xf32>
    %cst_15 = arith.constant dense<0.000000e+00> : vector<256xf32>
    %24 = vector.multi_reduction <add>, %22, %cst_15 [0] : vector<32x256xf32> to vector<256xf32>
    %25 = vector.shape_cast %24 : vector<256xf32> to vector<1x256xf32>
    %26 = arith.addf %23, %25 : vector<1x256xf32>
    %c0_16 = arith.constant 0 : index
    %c0_17 = arith.constant 0 : index
    %27 = vector.load %arg9[%c0_16, %c0_17] : memref<1x256xf32, #tpu.memory_space<vmem>>, vector<1x256xf32>
    tpu.vector_store %arg9[%c0_16, %c0_17], %26 {strides = array<i32>} : memref<1x256xf32, #tpu.memory_space<vmem>>, vector<1x256xf32>,
    %c0_18 = arith.constant 0 : index
    %c0_19 = arith.constant 0 : index
    %28 = vector.load %arg10[%c0_18, %c0_19] : memref<1x256xf32, #tpu.memory_space<vmem>>, vector<1x256xf32>
    %29 = arith.mulf %22, %22 : vector<32x256xf32>
    %cst_20 = arith.constant dense<0.000000e+00> : vector<256xf32>
    %30 = vector.multi_reduction <add>, %29, %cst_20 [0] : vector<32x256xf32> to vector<256xf32>
    %31 = vector.shape_cast %30 : vector<256xf32> to vector<1x256xf32>
    %32 = arith.addf %28, %31 : vector<1x256xf32>
    %c0_21 = arith.constant 0 : index
    %c0_22 = arith.constant 0 : index
    %33 = vector.load %arg10[%c0_21, %c0_22] : memref<1x256xf32, #tpu.memory_space<vmem>>, vector<1x256xf32>
    tpu.vector_store %arg10[%c0_21, %c0_22], %32 {strides = array<i32>} : memref<1x256xf32, #tpu.memory_space<vmem>>, vector<1x256xf32>,
    %c0_i32_23 = arith.constant 0 : i32
    %34 = arith.cmpi eq, %arg0, %c0_i32_23 : i32
    %35 = arith.extui %34 : i1 to i32
    %c0_i32_24 = arith.constant 0 : i32
    %36 = arith.cmpi ne, %35, %c0_i32_24 : i32
    scf.if %36 {
      %c0_25 = arith.constant 0 : index
      %c0_26 = arith.constant 0 : index
      %37 = vector.load %arg9[%c0_25, %c0_26] : memref<1x256xf32, #tpu.memory_space<vmem>>, vector<1x256xf32>
      %c0_27 = arith.constant 0 : index
      %c0_28 = arith.constant 0 : index
      %38 = vector.load %arg3[%c0_27, %c0_28] : memref<256x4xf32, #tpu.memory_space<vmem>>, vector<256x4xf32>
      %cst_29 = arith.constant dense<0.000000e+00> : vector<1x4xf32>
      %39 = tpu.matmul %37, %38, %cst_29 {dimension_numbers = #tpu.dot_dimension_numbers<[1], [0], [0], [1], [0, 0, 1, 1], [], []>} : vector<1x256xf32>, vector<256x4xf32>, vector<1x4xf32> -> vector<1x4xf32>
      %c0_30 = arith.constant 0 : index
      %c0_31 = arith.constant 0 : index
      %40 = vector.load %arg10[%c0_30, %c0_31] : memref<1x256xf32, #tpu.memory_space<vmem>>, vector<1x256xf32>
      %c0_32 = arith.constant 0 : index
      %c0_33 = arith.constant 0 : index
      %41 = vector.load %arg3[%c0_32, %c0_33] : memref<256x4xf32, #tpu.memory_space<vmem>>, vector<256x4xf32>
      %cst_34 = arith.constant dense<0.000000e+00> : vector<1x4xf32>
      %42 = tpu.matmul %40, %41, %cst_34 {dimension_numbers = #tpu.dot_dimension_numbers<[1], [0], [0], [1], [0, 0, 1, 1], [], []>} : vector<1x256xf32>, vector<256x4xf32>, vector<1x4xf32> -> vector<1x4xf32>
      %cst_35 = arith.constant 4.8828125E-4 : f32
      %43 = vector.broadcast %cst_35 : f32 to vector<1x4xf32>
      %44 = arith.mulf %39, %43 : vector<1x4xf32>
      %cst_36 = arith.constant 4.8828125E-4 : f32
      %45 = vector.broadcast %cst_36 : f32 to vector<1x4xf32>
      %46 = arith.mulf %42, %45 : vector<1x4xf32>
      %47 = arith.mulf %44, %44 : vector<1x4xf32>
      %48 = arith.subf %46, %47 : vector<1x4xf32>
      %cst_37 = arith.constant 9.99999974E-6 : f32
      %49 = vector.broadcast %cst_37 : f32 to vector<1x4xf32>
      %50 = arith.addf %48, %49 : vector<1x4xf32>
      %51 = math.rsqrt %50 : vector<1x4xf32>
      %c0_38 = arith.constant 0 : index
      %c0_39 = arith.constant 0 : index
      %52 = vector.load %arg5[%c0_38, %c0_39] : memref<1x4xf32, #tpu.memory_space<vmem>>, vector<1x4xf32>
      %53 = arith.mulf %52, %51 : vector<1x4xf32>
      %c0_40 = arith.constant 0 : index
      %c0_41 = arith.constant 0 : index
      %54 = vector.load %arg6[%c0_40, %c0_41] : memref<1x4xf32, #tpu.memory_space<vmem>>, vector<1x4xf32>
      %55 = arith.mulf %44, %53 : vector<1x4xf32>
      %56 = arith.subf %54, %55 : vector<1x4xf32>
      %c0_42 = arith.constant 0 : index
      %c0_43 = arith.constant 0 : index
      %57 = vector.load %arg4[%c0_42, %c0_43] : memref<4x256xf32, #tpu.memory_space<vmem>>, vector<4x256xf32>
      %cst_44 = arith.constant dense<0.000000e+00> : vector<1x256xf32>
      %58 = tpu.matmul %53, %57, %cst_44 {dimension_numbers = #tpu.dot_dimension_numbers<[1], [0], [0], [1], [0, 0, 1, 1], [], []>} : vector<1x4xf32>, vector<4x256xf32>, vector<1x256xf32> -> vector<1x256xf32>
      %c0_45 = arith.constant 0 : index
      %c0_46 = arith.constant 0 : index
      %59 = vector.load %arg4[%c0_45, %c0_46] : memref<4x256xf32, #tpu.memory_space<vmem>>, vector<4x256xf32>
      %cst_47 = arith.constant dense<0.000000e+00> : vector<1x256xf32>
      %60 = tpu.matmul %56, %59, %cst_47 {dimension_numbers = #tpu.dot_dimension_numbers<[1], [0], [0], [1], [0, 0, 1, 1], [], []>} : vector<1x4xf32>, vector<4x256xf32>, vector<1x256xf32> -> vector<1x256xf32>
      %61 = vector.broadcast %58 : vector<1x256xf32> to vector<32x256xf32>
      %62 = arith.mulf %22, %61 : vector<32x256xf32>
      %63 = vector.broadcast %60 : vector<1x256xf32> to vector<32x256xf32>
      %64 = arith.addf %62, %63 : vector<32x256xf32>
      %cst_48 = arith.constant 0.000000e+00 : f32
      %65 = vector.broadcast %cst_48 : f32 to vector<32x256xf32>
      %66 = arith.maximumf %64, %65 : vector<32x256xf32>
      %67 = vector.shape_cast %66 : vector<32x256xf32> to vector<2x16x256xf32>
      %c0_49 = arith.constant 0 : index
      %c0_50 = arith.constant 0 : index
      %c0_51 = arith.constant 0 : index
      %68 = vector.load %arg7[%c0_49, %c0_50, %c0_51] : memref<2x16x256xf32, #tpu.memory_space<vmem>>, vector<2x16x256xf32>
      tpu.vector_store %arg7[%c0_49, %c0_50, %c0_51], %67 {strides = array<i32>} : memref<2x16x256xf32, #tpu.memory_space<vmem>>, vector<2x16x256xf32>,
    } else {
    }
    return
  }
  func.func @transform_0(%arg0: i32) -> (i32, i32, i32) {
    %c0_i32 = arith.constant 0 : i32
    %c0_i32_0 = arith.constant 0 : i32
    %c0_i32_1 = arith.constant 0 : i32
    return %arg0, %c0_i32, %c0_i32_0 : i32, i32, i32
  }
  func.func @transform_2(%arg0: i32) -> (i32, i32) {
    %c0_i32 = arith.constant 0 : i32
    %c0_i32_0 = arith.constant 0 : i32
    %c0_i32_1 = arith.constant 0 : i32
    return %c0_i32, %c0_i32_0 : i32, i32
  }
  func.func @transform_3(%arg0: i32) -> (i32, i32) {
    %c0_i32 = arith.constant 0 : i32
    %c0_i32_0 = arith.constant 0 : i32
    %c0_i32_1 = arith.constant 0 : i32
    return %c0_i32, %c0_i32_0 : i32, i32
  }
  func.func @transform_4(%arg0: i32) -> (i32, i32) {
    %c0_i32 = arith.constant 0 : i32
    %c0_i32_0 = arith.constant 0 : i32
    %c0_i32_1 = arith.constant 0 : i32
    return %c0_i32, %c0_i32_0 : i32, i32
  }
  func.func @transform_5(%arg0: i32) -> (i32, i32) {
    %c0_i32 = arith.constant 0 : i32
    %c0_i32_0 = arith.constant 0 : i32
    %c0_i32_1 = arith.constant 0 : i32
    return %c0_i32, %c0_i32_0 : i32, i32
  }
  func.func @transform_6(%arg0: i32) -> (i32, i32, i32) {
    %c0_i32 = arith.constant 0 : i32
    %c0_i32_0 = arith.constant 0 : i32
    %c0_i32_1 = arith.constant 0 : i32
    %c0_i32_2 = arith.constant 0 : i32
    return %c0_i32, %c0_i32_0, %c0_i32_1 : i32, i32, i32
  }
}

</mosaic_0001>

<llo_original>
// kernel: rot_conv2d_forward.1
$region0: #{rot_conv2d_forward.1}
  #allocation0 [shape = 'u32[]', space=smem, size = 0x4, offset = 0x4, fixed_abs, tag = 'smem constant byte address 0x4 - core index']
  #allocation1 [shape = 'u32[144,128]{1,0:T(1,128)}', space=vmem, size = 0x12000, scoped, tag = 'internal scratch']
  #allocation2 [shape = 'bf16[3,288,256]{2,1,0:T(16,128)(2,1)}', space=vmem, size = 0x6c000, scoped, tag = 'scratch operand']
  #allocation3 [shape = 'f32[1,256]{1,0:T(1,128)}', space=vmem, size = 0x400, scoped, tag = 'scratch operand']
  #allocation4 [shape = 'f32[1,256]{1,0:T(1,128)}', space=vmem, size = 0x400, scoped, tag = 'scratch operand']
  #allocation6 [shape = 's32[]', space=sflag, size = 0x4, offset = 0, fixed_abs, tag = 'sflag constant byte address 0x0 - dummy sync flag']
  %s0 = inlined_call_operand.vmem [shape: bf16[2,18,288], index: 0, kind: input, shape index: {}]
  %s1 = inlined_call_operand.vmem [shape: bf16[3,288,256], index: 1, kind: input, shape index: {}]
  %s2 = inlined_call_operand.vmem [shape: f32[256,4], index: 2, kind: input, shape index: {}]
  %s3 = inlined_call_operand.vmem [shape: f32[4,256], index: 3, kind: input, shape index: {}]
  %s4 = inlined_call_operand.vmem [shape: f32[1,4], index: 4, kind: input, shape index: {}]
  %s5 = inlined_call_operand.vmem [shape: f32[1,4], index: 5, kind: input, shape index: {}]
  %s6 = inlined_call_operand.vmem [shape: f32[2,16,256], index: 6, kind: output, shape index: {}]
  %s7 = sld [smem:[#allocation0]]
  $region76: #{rot_conv2d_forward.1} parent=0
    _
  %s9 = ssub.s32 1, %s7
  %s10 = scalar_select 0, %s9, %s7
  // Predicated region
  $region2: #{rot_conv2d_forward.1} parent=0 // pred_check
    _
  $region3: #{rot_conv2d_forward.1} parent=0 // pred_check_branch
    %12 = sbr.rel (0) target = $region5
  $region4: #{rot_conv2d_forward.1} parent=0 // pred_region
    _
  $region5: #{rot_conv2d_forward.1} parent=0 // pred_fallthru
    _
  // Predicated region
  $region6: #{rot_conv2d_forward.1} parent=0 // pred_check
    _
  $region7: #{rot_conv2d_forward.1} parent=0 // pred_check_branch
    %14 = sbr.rel (0) target = $region9
  $region8: #{rot_conv2d_forward.1} parent=0 // pred_region
    _
  $region9: #{rot_conv2d_forward.1} parent=0 // pred_fallthru
    _
  // Predicated region
  $region10: #{rot_conv2d_forward.1} parent=0 // pred_check
    _
  $region11: #{rot_conv2d_forward.1} parent=0 // pred_check_branch
    %16 = sbr.rel (0) target = $region13
  $region12: #{rot_conv2d_forward.1} parent=0 // pred_region
    _
  $region13: #{rot_conv2d_forward.1} parent=0 // pred_fallthru
    _
  // Predicated region
  $region14: #{rot_conv2d_forward.1} parent=0 // pred_check
    _
  $region15: #{rot_conv2d_forward.1} parent=0 // pred_check_branch
    %18 = sbr.rel (0) target = $region17
  $region16: #{rot_conv2d_forward.1} parent=0 // pred_region
    _
  $region17: #{rot_conv2d_forward.1} parent=0 // pred_fallthru
    _
  // Predicated region
  $region18: #{rot_conv2d_forward.1} parent=0 // pred_check
    _
  $region19: #{rot_conv2d_forward.1} parent=0 // pred_check_branch
    %20 = sbr.rel (0) target = $region21
  $region20: #{rot_conv2d_forward.1} parent=0 // pred_region
    _
  $region21: #{rot_conv2d_forward.1} parent=0 // pred_fallthru
    _
  %p22 = scmp.eq.s32.totalorder 0, 0
  // Predicated region
  $region22: #{rot_conv2d_forward.1} parent=0 // pred_check
    %p23 = pneg %p22
  $region23: #{rot_conv2d_forward.1} parent=0 // pred_check_branch
    %25 = sbr.rel (%p23) target = $region25
  $region24: #{rot_conv2d_forward.1} parent=0 // pred_region
    $region26: #{rot_conv2d_forward.1} parent=24
      #allocation5 [shape = 's32[1]{0}', space=sflag, size = 0x4, scoped, tag = 'scoped memory for rot_conv2d_forward.1']
      %p27 = scmp.lt.u32.totalorder 4, 8
      %p28 = pneg %p27
      // Predicated region
      $region27: #{rot_conv2d_forward.1} parent=26 // pred_check
        _
      $region28: #{rot_conv2d_forward.1} parent=26 // pred_check_branch
        %30 = sbr.rel (%p27) target = $region30
      $region29: #{rot_conv2d_forward.1} parent=26 // pred_region
        %s475 = sand.u32 4, 7
        %p476 = scmp.eq.s32.totalorder %s475, 0
        %p477 = pneg %p476
        // Predicated region
        $region42: #{rot_conv2d_forward.1} parent=29 // pred_check
          _
        $region43: #{rot_conv2d_forward.1} parent=29 // pred_check_branch
          %479 = sbr.rel (%p476) target = $region45
        $region44: #{rot_conv2d_forward.1} parent=29 // pred_region
          %s480 = sand.u32 4, 7
          %s481 = ssub.s32 4, %s480
          %s482 = scalar_lea.vmem %s1, %s481
          %s483 = ssub.s32 4, %s480
          %s484 = scalar_lea.vmem [#allocation2], %s483
          loop: start=0, step=1, limit=1
          $region46: #{rot_conv2d_forward.1} parent=44 // loop_pre_header
            _
          $region47: #{rot_conv2d_forward.1} parent=44 // loop_header
            %s486 = sphi 0, %s490
            %p487 = scmp.ge.s32.totalorder %s486, 1
            %s491 = sphi %s1, %s1
            %s492 = sphi [#allocation2], [#allocation2]
          $region48: #{rot_conv2d_forward.1} parent=44 // loop_header_branch
            %489 = sbr.rel (%p487) target = $region52
          $region49: #{rot_conv2d_forward.1} parent=44 // loop_body
            _
          $region50: #{rot_conv2d_forward.1} parent=44 // loop_footer
            %s490 = sadd.s32 1, %s486
          $region51: #{rot_conv2d_forward.1} parent=44 // loop_footer_branch
            %485 = sbr.rel target = $region47
          $region52: #{rot_conv2d_forward.1} parent=44 // loop_exit
            _
          %s493 = sshllo.u32 0, %s480
          loop: start=0, step=1, limit=1
          $region53: #{rot_conv2d_forward.1} parent=44 // loop_pre_header
            _
          $region54: #{rot_conv2d_forward.1} parent=44 // loop_header
            %s495 = sphi 0, %s499
            %p496 = scmp.ge.s32.totalorder %s495, 1
            %s500 = sphi %s482, %s482
            %s501 = sphi %s484, %s484
          $region55: #{rot_conv2d_forward.1} parent=44 // loop_header_branch
            %498 = sbr.rel (%p496) target = $region59
          $region56: #{rot_conv2d_forward.1} parent=44 // loop_body
            %v502 = vld [vmem:[%s500] sm:%s493]
            %503 = vst [vmem:[%s501] sm:%s493] %v502
            %v504 = vld [vmem:[%s500 + $0x8] sm:%s493]
            %505 = vst [vmem:[%s501 + $0x4] sm:%s493] %v504
            %v506 = vld [vmem:[%s500 + $0x4] sm:%s493]
            %507 = vst [vmem:[%s501 + $0x8] sm:%s493] %v506
            %v508 = vld [vmem:[%s500 + $0xc] sm:%s493]
            %509 = vst [vmem:[%s501 + $0xc] sm:%s493] %v508
            %v510 = vld [vmem:[%s500 + $0x10] sm:%s493]
            %511 = vst [vmem:[%s501 + $0x10] sm:%s493] %v510
            %v512 = vld [vmem:[%s500 + $0x18] sm:%s493]
            %513 = vst [vmem:[%s501 + $0x14] sm:%s493] %v512
            %v514 = vld [vmem:[%s500 + $0x14] sm:%s493]
            %515 = vst [vmem:[%s501 + $0x18] sm:%s493] %v514
            %v516 = vld [vmem:[%s500 + $0x1c] sm:%s493]
            %517 = vst [vmem:[%s501 + $0x1c] sm:%s493] %v516
            %v518 = vld [vmem:[%s500 + $0x20] sm:%s493]
            %519 = vst [vmem:[%s501 + $0x20] sm:%s493] %v518
            %v520 = vld [vmem:[%s500 + $0x28] sm:%s493]
            %521 = vst [vmem:[%s501 + $0x24] sm:%s493] %v520
            %v522 = vld [vmem:[%s500 + $0x24] sm:%s493]
            %523 = vst [vmem:[%s501 + $0x28] sm:%s493] %v522
            %v524 = vld [vmem:[%s500 + $0x2c] sm:%s493]
            %525 = vst [vmem:[%s501 + $0x2c] sm:%s493] %v524
            %v526 = vld [vmem:[%s500 + $0x30] sm:%s493]
            %527 = vst [vmem:[%s501 + $0x30] sm:%s493] %v526
            %v528 = vld [vmem:[%s500 + $0x38] sm:%s493]
            %529 = vst [vmem:[%s501 + $0x34] sm:%s493] %v528
            %v530 = vld [vmem:[%s500 + $0x34] sm:%s493]
            %531 = vst [vmem:[%s501 + $0x38] sm:%s493] %v530
            %v532 = vld [vmem:[%s500 + $0x3c] sm:%s493]
            %533 = vst [vmem:[%s501 + $0x3c] sm:%s493] %v532
            %v534 = vld [vmem:[%s500 + $0x40] sm:%s493]
            %535 = vst [vmem:[%s501 + $0x40] sm:%s493] %v534
            %v536 = vld [vmem:[%s500 + $0x48] sm:%s493]
            %537 = vst [vmem:[%s501 + $0x44] sm:%s493] %v536
            %v538 = vld [vmem:[%s500 + $0x44] sm:%s493]
            %539 = vst [vmem:[%s501 + $0x48] sm:%s493] %v538
            %v540 = vld [vmem:[%s500 + $0x4c] sm:%s493]
            %541 = vst [vmem:[%s501 + $0x4c] sm:%s493] %v540
            %v542 = vld [vmem:[%s500 + $0x50] sm:%s493]
            %543 = vst [vmem:[%s501 + $0x50] sm:%s493] %v542
            %v544 = vld [vmem:[%s500 + $0x58] sm:%s493]
            %545 = vst [vmem:[%s501 + $0x54] sm:%s493] %v544
            %v546 = vld [vmem:[%s500 + $0x54] sm:%s493]
            %547 = vst [vmem:[%s501 + $0x58] sm:%s493] %v546
            %v548 = vld [vmem:[%s500 + $0x5c] sm:%s493]
            %549 = vst [vmem:[%s501 + $0x5c] sm:%s493] %v548
            %v550 = vld [vmem:[%s500 + $0x60] sm:%s493]
            %551 = vst [vmem:[%s501 + $0x60] sm:%s493] %v550
            %v552 = vld [vmem:[%s500 + $0x68] sm:%s493]
            %553 = vst [vmem:[%s501 + $0x64] sm:%s493] %v552
            %v554 = vld [vmem:[%s500 + $0x64] sm:%s493]
            %555 = vst [vmem:[%s501 + $0x68] sm:%s493] %v554
            %v556 = vld [vmem:[%s500 + $0x6c] sm:%s493]
            %557 = vst [vmem:[%s501 + $0x6c] sm:%s493] %v556
            %v558 = vld [vmem:[%s500 + $0x70] sm:%s493]
            %559 = vst [vmem:[%s501 + $0x70] sm:%s493] %v558
            %v560 = vld [vmem:[%s500 + $0x78] sm:%s493]
            %561 = vst [vmem:[%s501 + $0x74] sm:%s493] %v560
            %v562 = vld [vmem:[%s500 + $0x74] sm:%s493]
            %563 = vst [vmem:[%s501 + $0x78] sm:%s493] %v562
            %v564 = vld [vmem:[%s500 + $0x7c] sm:%s493]
            %565 = vst [vmem:[%s501 + $0x7c] sm:%s493] %v564
            %v566 = vld [vmem:[%s500 + $0x80] sm:%s493]
            %567 = vst [vmem:[%s501 + $0x80] sm:%s493] %v566
            %v568 = vld [vmem:[%s500 + $0x88] sm:%s493]
            %569 = vst [vmem:[%s501 + $0x84] sm:%s493] %v568
            %v570 = vld [vmem:[%s500 + $0x84] sm:%s493]
            %571 = vst [vmem:[%s501 + $0x88] sm:%s493] %v570
            %v572 = vld [vmem:[%s500 + $0x8c] sm:%s493]
            %573 = vst [vmem:[%s501 + $0x8c] sm:%s493] %v572
            %v574 = vld [vmem:[%s500 + $0x90] sm:%s493]
            %575 = vst [vmem:[%s501 + $0x90] sm:%s493] %v574
            %v576 = vld [vmem:[%s500 + $0x98] sm:%s493]
            %577 = vst [vmem:[%s501 + $0x94] sm:%s493] %v576
            %v578 = vld [vmem:[%s500 + $0x94] sm:%s493]
            %579 = vst [vmem:[%s501 + $0x98] sm:%s493] %v578
            %v580 = vld [vmem:[%s500 + $0x9c] sm:%s493]
            %581 = vst [vmem:[%s501 + $0x9c] sm:%s493] %v580
            %v582 = vld [vmem:[%s500 + $0xa0] sm:%s493]
            %583 = vst [vmem:[%s501 + $0xa0] sm:%s493] %v582
            %v584 = vld [vmem:[%s500 + $0xa8] sm:%s493]
            %585 = vst [vmem:[%s501 + $0xa4] sm:%s493] %v584
            %v586 = vld [vmem:[%s500 + $0xa4] sm:%s493]
            %587 = vst [vmem:[%s501 + $0xa8] sm:%s493] %v586
            %v588 = vld [vmem:[%s500 + $0xac] sm:%s493]
            %589 = vst [vmem:[%s501 + $0xac] sm:%s493] %v588
            %v590 = vld [vmem:[%s500 + $0xb0] sm:%s493]
            %591 = vst [vmem:[%s501 + $0xb0] sm:%s493] %v590
            %v592 = vld [vmem:[%s500 + $0xb8] sm:%s493]
            %593 = vst [vmem:[%s501 + $0xb4] sm:%s493] %v592
            %v594 = vld [vmem:[%s500 + $0xb4] sm:%s493]
            %595 = vst [vmem:[%s501 + $0xb8] sm:%s493] %v594
            %v596 = vld [vmem:[%s500 + $0xbc] sm:%s493]
            %597 = vst [vmem:[%s501 + $0xbc] sm:%s493] %v596
            %v598 = vld [vmem:[%s500 + $0xc0] sm:%s493]
            %599 = vst [vmem:[%s501 + $0xc0] sm:%s493] %v598
            %v600 = vld [vmem:[%s500 + $0xc8] sm:%s493]
            %601 = vst [vmem:[%s501 + $0xc4] sm:%s493] %v600
            %v602 = vld [vmem:[%s500 + $0xc4] sm:%s493]
            %603 = vst [vmem:[%s501 + $0xc8] sm:%s493] %v602
            %v604 = vld [vmem:[%s500 + $0xcc] sm:%s493]
            %605 = vst [vmem:[%s501 + $0xcc] sm:%s493] %v604
            %v606 = vld [vmem:[%s500 + $0xd0] sm:%s493]
            %607 = vst [vmem:[%s501 + $0xd0] sm:%s493] %v606
            %v608 = vld [vmem:[%s500 + $0xd8] sm:%s493]
            %609 = vst [vmem:[%s501 + $0xd4] sm:%s493] %v608
            %v610 = vld [vmem:[%s500 + $0xd4] sm:%s493]
            %611 = vst [vmem:[%s501 + $0xd8] sm:%s493] %v610
            %v612 = vld [vmem:[%s500 + $0xdc] sm:%s493]
            %613 = vst [vmem:[%s501 + $0xdc] sm:%s493] %v612
            %v614 = vld [vmem:[%s500 + $0xe0] sm:%s493]
            %615 = vst [vmem:[%s501 + $0xe0] sm:%s493] %v614
            %v616 = vld [vmem:[%s500 + $0xe8] sm:%s493]
            %617 = vst [vmem:[%s501 + $0xe4] sm:%s493] %v616
            %v618 = vld [vmem:[%s500 + $0xe4] sm:%s493]
            %619 = vst [vmem:[%s501 + $0xe8] sm:%s493] %v618
            %v620 = vld [vmem:[%s500 + $0xec] sm:%s493]
            %621 = vst [vmem:[%s501 + $0xec] sm:%s493] %v620
            %v622 = vld [vmem:[%s500 + $0xf0] sm:%s493]
            %623 = vst [vmem:[%s501 + $0xf0] sm:%s493] %v622
            %v624 = vld [vmem:[%s500 + $0xf8] sm:%s493]
            %625 = vst [vmem:[%s501 + $0xf4] sm:%s493] %v624
            %v626 = vld [vmem:[%s500 + $0xf4] sm:%s493]
            %627 = vst [vmem:[%s501 + $0xf8] sm:%s493] %v626
            %v628 = vld [vmem:[%s500 + $0xfc] sm:%s493]
            %629 = vst [vmem:[%s501 + $0xfc] sm:%s493] %v628
            %v630 = vld [vmem:[%s500 + $0x100] sm:%s493]
            %631 = vst [vmem:[%s501 + $0x100] sm:%s493] %v630
            %v632 = vld [vmem:[%s500 + $0x108] sm:%s493]
            %633 = vst [vmem:[%s501 + $0x104] sm:%s493] %v632
            %v634 = vld [vmem:[%s500 + $0x104] sm:%s493]
            %635 = vst [vmem:[%s501 + $0x108] sm:%s493] %v634
            %v636 = vld [vmem:[%s500 + $0x10c] sm:%s493]
            %637 = vst [vmem:[%s501 + $0x10c] sm:%s493] %v636
            %v638 = vld [vmem:[%s500 + $0x110] sm:%s493]
            %639 = vst [vmem:[%s501 + $0x110] sm:%s493] %v638
            %v640 = vld [vmem:[%s500 + $0x118] sm:%s493]
            %641 = vst [vmem:[%s501 + $0x114] sm:%s493] %v640
            %v642 = vld [vmem:[%s500 + $0x114] sm:%s493]
            %643 = vst [vmem:[%s501 + $0x118] sm:%s493] %v642
            %v644 = vld [vmem:[%s500 + $0x11c] sm:%s493]
            %645 = vst [vmem:[%s501 + $0x11c] sm:%s493] %v644
            %v646 = vld [vmem:[%s500 + $0x120] sm:%s493]
            %647 = vst [vmem:[%s501 + $0x120] sm:%s493] %v646
            %v648 = vld [vmem:[%s500 + $0x128] sm:%s493]
            %649 = vst [vmem:[%s501 + $0x124] sm:%s493] %v648
            %v650 = vld [vmem:[%s500 + $0x124] sm:%s493]
            %651 = vst [vmem:[%s501 + $0x128] sm:%s493] %v650
            %v652 = vld [vmem:[%s500 + $0x12c] sm:%s493]
            %653 = vst [vmem:[%s501 + $0x12c] sm:%s493] %v652
            %v654 = vld [vmem:[%s500 + $0x130] sm:%s493]
            %655 = vst [vmem:[%s501 + $0x130] sm:%s493] %v654
            %v656 = vld [vmem:[%s500 + $0x138] sm:%s493]
            %657 = vst [vmem:[%s501 + $0x134] sm:%s493] %v656
            %v658 = vld [vmem:[%s500 + $0x134] sm:%s493]
            %659 = vst [vmem:[%s501 + $0x138] sm:%s493] %v658
            %v660 = vld [vmem:[%s500 + $0x13c] sm:%s493]
            %661 = vst [vmem:[%s501 + $0x13c] sm:%s493] %v660
            %v662 = vld [vmem:[%s500 + $0x140] sm:%s493]
            %663 = vst [vmem:[%s501 + $0x140] sm:%s493] %v662
            %v664 = vld [vmem:[%s500 + $0x148] sm:%s493]
            %665 = vst [vmem:[%s501 + $0x144] sm:%s493] %v664
            %v666 = vld [vmem:[%s500 + $0x144] sm:%s493]
            %667 = vst [vmem:[%s501 + $0x148] sm:%s493] %v666
            %v668 = vld [vmem:[%s500 + $0x14c] sm:%s493]
            %669 = vst [vmem:[%s501 + $0x14c] sm:%s493] %v668
            %v670 = vld [vmem:[%s500 + $0x150] sm:%s493]
            %671 = vst [vmem:[%s501 + $0x150] sm:%s493] %v670
            %v672 = vld [vmem:[%s500 + $0x158] sm:%s493]
            %673 = vst [vmem:[%s501 + $0x154] sm:%s493] %v672
            %v674 = vld [vmem:[%s500 + $0x154] sm:%s493]
            %675 = vst [vmem:[%s501 + $0x158] sm:%s493] %v674
            %v676 = vld [vmem:[%s500 + $0x15c] sm:%s493]
            %677 = vst [vmem:[%s501 + $0x15c] sm:%s493] %v676
            %v678 = vld [vmem:[%s500 + $0x160] sm:%s493]
            %679 = vst [vmem:[%s501 + $0x160] sm:%s493] %v678
            %v680 = vld [vmem:[%s500 + $0x168] sm:%s493]
            %681 = vst [vmem:[%s501 + $0x164] sm:%s493] %v680
            %v682 = vld [vmem:[%s500 + $0x164] sm:%s493]
            %683 = vst [vmem:[%s501 + $0x168] sm:%s493] %v682
            %v684 = vld [vmem:[%s500 + $0x16c] sm:%s493]
            %685 = vst [vmem:[%s501 + $0x16c] sm:%s493] %v684
            %v686 = vld [vmem:[%s500 + $0x170] sm:%s493]
            %687 = vst [vmem:[%s501 + $0x170] sm:%s493] %v686
            %v688 = vld [vmem:[%s500 + $0x178] sm:%s493]
            %689 = vst [vmem:[%s501 + $0x174] sm:%s493] %v688
            %v690 = vld [vmem:[%s500 + $0x174] sm:%s493]
            %691 = vst [vmem:[%s501 + $0x178] sm:%s493] %v690
            %v692 = vld [vmem:[%s500 + $0x17c] sm:%s493]
            %693 = vst [vmem:[%s501 + $0x17c] sm:%s493] %v692
            %v694 = vld [vmem:[%s500 + $0x180] sm:%s493]
            %695 = vst [vmem:[%s501 + $0x180] sm:%s493] %v694
            %v696 = vld [vmem:[%s500 + $0x188] sm:%s493]
            %697 = vst [vmem:[%s501 + $0x184] sm:%s493] %v696
            %v698 = vld [vmem:[%s500 + $0x184] sm:%s493]
            %699 = vst [vmem:[%s501 + $0x188] sm:%s493] %v698
            %v700 = vld [vmem:[%s500 + $0x18c] sm:%s493]
            %701 = vst [vmem:[%s501 + $0x18c] sm:%s493] %v700
            %v702 = vld [vmem:[%s500 + $0x190] sm:%s493]
            %703 = vst [vmem:[%s501 + $0x190] sm:%s493] %v702
            %v704 = vld [vmem:[%s500 + $0x198] sm:%s493]
            %705 = vst [vmem:[%s501 + $0x194] sm:%s493] %v704
            %v706 = vld [vmem:[%s500 + $0x194] sm:%s493]
            %707 = vst [vmem:[%s501 + $0x198] sm:%s493] %v706
            %v708 = vld [vmem:[%s500 + $0x19c] sm:%s493]
            %709 = vst [vmem:[%s501 + $0x19c] sm:%s493] %v708
            %v710 = vld [vmem:[%s500 + $0x1a0] sm:%s493]
            %711 = vst [vmem:[%s501 + $0x1a0] sm:%s493] %v710
            %v712 = vld [vmem:[%s500 + $0x1a8] sm:%s493]
            %713 = vst [vmem:[%s501 + $0x1a4] sm:%s493] %v712
            %v714 = vld [vmem:[%s500 + $0x1a4] sm:%s493]
            %715 = vst [vmem:[%s501 + $0x1a8] sm:%s493] %v714
            %v716 = vld [vmem:[%s500 + $0x1ac] sm:%s493]
            %717 = vst [vmem:[%s501 + $0x1ac] sm:%s493] %v716
            %v718 = vld [vmem:[%s500 + $0x1b0] sm:%s493]
            %719 = vst [vmem:[%s501 + $0x1b0] sm:%s493] %v718
            %v720 = vld [vmem:[%s500 + $0x1b8] sm:%s493]
            %721 = vst [vmem:[%s501 + $0x1b4] sm:%s493] %v720
            %v722 = vld [vmem:[%s500 + $0x1b4] sm:%s493]
            %723 = vst [vmem:[%s501 + $0x1b8] sm:%s493] %v722
            %v724 = vld [vmem:[%s500 + $0x1bc] sm:%s493]
            %725 = vst [vmem:[%s501 + $0x1bc] sm:%s493] %v724
            %v726 = vld [vmem:[%s500 + $0x1c0] sm:%s493]
            %727 = vst [vmem:[%s501 + $0x1c0] sm:%s493] %v726
            %v728 = vld [vmem:[%s500 + $0x1c8] sm:%s493]
            %729 = vst [vmem:[%s501 + $0x1c4] sm:%s493] %v728
            %v730 = vld [vmem:[%s500 + $0x1c4] sm:%s493]
            %731 = vst [vmem:[%s501 + $0x1c8] sm:%s493] %v730
            %v732 = vld [vmem:[%s500 + $0x1cc] sm:%s493]
            %733 = vst [vmem:[%s501 + $0x1cc] sm:%s493] %v732
            %v734 = vld [vmem:[%s500 + $0x1d0] sm:%s493]
            %735 = vst [vmem:[%s501 + $0x1d0] sm:%s493] %v734
            %v736 = vld [vmem:[%s500 + $0x1d8] sm:%s493]
            %737 = vst [vmem:[%s501 + $0x1d4] sm:%s493] %v736
            %v738 = vld [vmem:[%s500 + $0x1d4] sm:%s493]
            %739 = vst [vmem:[%s501 + $0x1d8] sm:%s493] %v738
            %v740 = vld [vmem:[%s500 + $0x1dc] sm:%s493]
            %741 = vst [vmem:[%s501 + $0x1dc] sm:%s493] %v740
            %v742 = vld [vmem:[%s500 + $0x1e0] sm:%s493]
            %743 = vst [vmem:[%s501 + $0x1e0] sm:%s493] %v742
            %v744 = vld [vmem:[%s500 + $0x1e8] sm:%s493]
            %745 = vst [vmem:[%s501 + $0x1e4] sm:%s493] %v744
            %v746 = vld [vmem:[%s500 + $0x1e4] sm:%s493]
            %747 = vst [vmem:[%s501 + $0x1e8] sm:%s493] %v746
            %v748 = vld [vmem:[%s500 + $0x1ec] sm:%s493]
            %749 = vst [vmem:[%s501 + $0x1ec] sm:%s493] %v748
            %v750 = vld [vmem:[%s500 + $0x1f0] sm:%s493]
            %751 = vst [vmem:[%s501 + $0x1f0] sm:%s493] %v750
            %v752 = vld [vmem:[%s500 + $0x1f8] sm:%s493]
            %753 = vst [vmem:[%s501 + $0x1f4] sm:%s493] %v752
            %v754 = vld [vmem:[%s500 + $0x1f4] sm:%s493]
            %755 = vst [vmem:[%s501 + $0x1f8] sm:%s493] %v754
            %v756 = vld [vmem:[%s500 + $0x1fc] sm:%s493]
            %757 = vst [vmem:[%s501 + $0x1fc] sm:%s493] %v756
            %v758 = vld [vmem:[%s500 + $0x200] sm:%s493]
            %759 = vst [vmem:[%s501 + $0x200] sm:%s493] %v758
            %v760 = vld [vmem:[%s500 + $0x208] sm:%s493]
            %761 = vst [vmem:[%s501 + $0x204] sm:%s493] %v760
            %v762 = vld [vmem:[%s500 + $0x204] sm:%s493]
            %763 = vst [vmem:[%s501 + $0x208] sm:%s493] %v762
            %v764 = vld [vmem:[%s500 + $0x20c] sm:%s493]
            %765 = vst [vmem:[%s501 + $0x20c] sm:%s493] %v764
            %v766 = vld [vmem:[%s500 + $0x210] sm:%s493]
            %767 = vst [vmem:[%s501 + $0x210] sm:%s493] %v766
            %v768 = vld [vmem:[%s500 + $0x218] sm:%s493]
            %769 = vst [vmem:[%s501 + $0x214] sm:%s493] %v768
            %v770 = vld [vmem:[%s500 + $0x214] sm:%s493]
            %771 = vst [vmem:[%s501 + $0x218] sm:%s493] %v770
            %v772 = vld [vmem:[%s500 + $0x21c] sm:%s493]
            %773 = vst [vmem:[%s501 + $0x21c] sm:%s493] %v772
            %v774 = vld [vmem:[%s500 + $0x220] sm:%s493]
            %775 = vst [vmem:[%s501 + $0x220] sm:%s493] %v774
            %v776 = vld [vmem:[%s500 + $0x228] sm:%s493]
            %777 = vst [vmem:[%s501 + $0x224] sm:%s493] %v776
            %v778 = vld [vmem:[%s500 + $0x224] sm:%s493]
            %779 = vst [vmem:[%s501 + $0x228] sm:%s493] %v778
            %v780 = vld [vmem:[%s500 + $0x22c] sm:%s493]
            %781 = vst [vmem:[%s501 + $0x22c] sm:%s493] %v780
            %v782 = vld [vmem:[%s500 + $0x230] sm:%s493]
            %783 = vst [vmem:[%s501 + $0x230] sm:%s493] %v782
            %v784 = vld [vmem:[%s500 + $0x238] sm:%s493]
            %785 = vst [vmem:[%s501 + $0x234] sm:%s493] %v784
            %v786 = vld [vmem:[%s500 + $0x234] sm:%s493]
            %787 = vst [vmem:[%s501 + $0x238] sm:%s493] %v786
            %v788 = vld [vmem:[%s500 + $0x23c] sm:%s493]
            %789 = vst [vmem:[%s501 + $0x23c] sm:%s493] %v788
            %v790 = vld [vmem:[%s500 + $0x240] sm:%s493]
            %791 = vst [vmem:[%s501 + $0x240] sm:%s493] %v790
            %v792 = vld [vmem:[%s500 + $0x248] sm:%s493]
            %793 = vst [vmem:[%s501 + $0x244] sm:%s493] %v792
            %v794 = vld [vmem:[%s500 + $0x244] sm:%s493]
            %795 = vst [vmem:[%s501 + $0x248] sm:%s493] %v794
            %v796 = vld [vmem:[%s500 + $0x24c] sm:%s493]
            %797 = vst [vmem:[%s501 + $0x24c] sm:%s493] %v796
            %v798 = vld [vmem:[%s500 + $0x250] sm:%s493]
            %799 = vst [vmem:[%s501 + $0x250] sm:%s493] %v798
            %v800 = vld [vmem:[%s500 + $0x258] sm:%s493]
            %801 = vst [vmem:[%s501 + $0x254] sm:%s493] %v800
            %v802 = vld [vmem:[%s500 + $0x254] sm:%s493]
            %803 = vst [vmem:[%s501 + $0x258] sm:%s493] %v802
            %v804 = vld [vmem:[%s500 + $0x25c] sm:%s493]
            %805 = vst [vmem:[%s501 + $0x25c] sm:%s493] %v804
            %v806 = vld [vmem:[%s500 + $0x260] sm:%s493]
            %807 = vst [vmem:[%s501 + $0x260] sm:%s493] %v806
            %v808 = vld [vmem:[%s500 + $0x268] sm:%s493]
            %809 = vst [vmem:[%s501 + $0x264] sm:%s493] %v808
            %v810 = vld [vmem:[%s500 + $0x264] sm:%s493]
            %811 = vst [vmem:[%s501 + $0x268] sm:%s493] %v810
            %v812 = vld [vmem:[%s500 + $0x26c] sm:%s493]
            %813 = vst [vmem:[%s501 + $0x26c] sm:%s493] %v812
            %v814 = vld [vmem:[%s500 + $0x270] sm:%s493]
            %815 = vst [vmem:[%s501 + $0x270] sm:%s493] %v814
            %v816 = vld [vmem:[%s500 + $0x278] sm:%s493]
            %817 = vst [vmem:[%s501 + $0x274] sm:%s493] %v816
            %v818 = vld [vmem:[%s500 + $0x274] sm:%s493]
            %819 = vst [vmem:[%s501 + $0x278] sm:%s493] %v818
            %v820 = vld [vmem:[%s500 + $0x27c] sm:%s493]
            %821 = vst [vmem:[%s501 + $0x27c] sm:%s493] %v820
            %v822 = vld [vmem:[%s500 + $0x280] sm:%s493]
            %823 = vst [vmem:[%s501 + $0x280] sm:%s493] %v822
            %v824 = vld [vmem:[%s500 + $0x288] sm:%s493]
            %825 = vst [vmem:[%s501 + $0x284] sm:%s493] %v824
            %v826 = vld [vmem:[%s500 + $0x284] sm:%s493]
            %827 = vst [vmem:[%s501 + $0x288] sm:%s493] %v826
            %v828 = vld [vmem:[%s500 + $0x28c] sm:%s493]
            %829 = vst [vmem:[%s501 + $0x28c] sm:%s493] %v828
            %v830 = vld [vmem:[%s500 + $0x290] sm:%s493]
            %831 = vst [vmem:[%s501 + $0x290] sm:%s493] %v830
            %v832 = vld [vmem:[%s500 + $0x298] sm:%s493]
            %833 = vst [vmem:[%s501 + $0x294] sm:%s493] %v832
            %v834 = vld [vmem:[%s500 + $0x294] sm:%s493]
            %835 = vst [vmem:[%s501 + $0x298] sm:%s493] %v834
            %v836 = vld [vmem:[%s500 + $0x29c] sm:%s493]
            %837 = vst [vmem:[%s501 + $0x29c] sm:%s493] %v836
            %v838 = vld [vmem:[%s500 + $0x2a0] sm:%s493]
            %839 = vst [vmem:[%s501 + $0x2a0] sm:%s493] %v838
            %v840 = vld [vmem:[%s500 + $0x2a8] sm:%s493]
            %841 = vst [vmem:[%s501 + $0x2a4] sm:%s493] %v840
            %v842 = vld [vmem:[%s500 + $0x2a4] sm:%s493]
            %843 = vst [vmem:[%s501 + $0x2a8] sm:%s493] %v842
            %v844 = vld [vmem:[%s500 + $0x2ac] sm:%s493]
            %845 = vst [vmem:[%s501 + $0x2ac] sm:%s493] %v844
            %v846 = vld [vmem:[%s500 + $0x2b0] sm:%s493]
            %847 = vst [vmem:[%s501 + $0x2b0] sm:%s493] %v846
            %v848 = vld [vmem:[%s500 + $0x2b8] sm:%s493]
            %849 = vst [vmem:[%s501 + $0x2b4] sm:%s493] %v848
            %v850 = vld [vmem:[%s500 + $0x2b4] sm:%s493]
            %851 = vst [vmem:[%s501 + $0x2b8] sm:%s493] %v850
            %v852 = vld [vmem:[%s500 + $0x2bc] sm:%s493]
            %853 = vst [vmem:[%s501 + $0x2bc] sm:%s493] %v852
            %v854 = vld [vmem:[%s500 + $0x2c0] sm:%s493]
            %855 = vst [vmem:[%s501 + $0x2c0] sm:%s493] %v854
            %v856 = vld [vmem:[%s500 + $0x2c8] sm:%s493]
            %857 = vst [vmem:[%s501 + $0x2c4] sm:%s493] %v856
            %v858 = vld [vmem:[%s500 + $0x2c4] sm:%s493]
            %859 = vst [vmem:[%s501 + $0x2c8] sm:%s493] %v858
            %v860 = vld [vmem:[%s500 + $0x2cc] sm:%s493]
            %861 = vst [vmem:[%s501 + $0x2cc] sm:%s493] %v860
            %v862 = vld [vmem:[%s500 + $0x2d0] sm:%s493]
            %863 = vst [vmem:[%s501 + $0x2d0] sm:%s493] %v862
            %v864 = vld [vmem:[%s500 + $0x2d8] sm:%s493]
            %865 = vst [vmem:[%s501 + $0x2d4] sm:%s493] %v864
            %v866 = vld [vmem:[%s500 + $0x2d4] sm:%s493]
            %867 = vst [vmem:[%s501 + $0x2d8] sm:%s493] %v866
            %v868 = vld [vmem:[%s500 + $0x2dc] sm:%s493]
            %869 = vst [vmem:[%s501 + $0x2dc] sm:%s493] %v868
            %v870 = vld [vmem:[%s500 + $0x2e0] sm:%s493]
            %871 = vst [vmem:[%s501 + $0x2e0] sm:%s493] %v870
            %v872 = vld [vmem:[%s500 + $0x2e8] sm:%s493]
            %873 = vst [vmem:[%s501 + $0x2e4] sm:%s493] %v872
            %v874 = vld [vmem:[%s500 + $0x2e4] sm:%s493]
            %875 = vst [vmem:[%s501 + $0x2e8] sm:%s493] %v874
            %v876 = vld [vmem:[%s500 + $0x2ec] sm:%s493]
            %877 = vst [vmem:[%s501 + $0x2ec] sm:%s493] %v876
            %v878 = vld [vmem:[%s500 + $0x2f0] sm:%s493]
            %879 = vst [vmem:[%s501 + $0x2f0] sm:%s493] %v878
            %v880 = vld [vmem:[%s500 + $0x2f8] sm:%s493]
            %881 = vst [vmem:[%s501 + $0x2f4] sm:%s493] %v880
            %v882 = vld [vmem:[%s500 + $0x2f4] sm:%s493]
            %883 = vst [vmem:[%s501 + $0x2f8] sm:%s493] %v882
            %v884 = vld [vmem:[%s500 + $0x2fc] sm:%s493]
            %885 = vst [vmem:[%s501 + $0x2fc] sm:%s493] %v884
            %v886 = vld [vmem:[%s500 + $0x300] sm:%s493]
            %887 = vst [vmem:[%s501 + $0x300] sm:%s493] %v886
            %v888 = vld [vmem:[%s500 + $0x308] sm:%s493]
            %889 = vst [vmem:[%s501 + $0x304] sm:%s493] %v888
            %v890 = vld [vmem:[%s500 + $0x304] sm:%s493]
            %891 = vst [vmem:[%s501 + $0x308] sm:%s493] %v890
            %v892 = vld [vmem:[%s500 + $0x30c] sm:%s493]
            %893 = vst [vmem:[%s501 + $0x30c] sm:%s493] %v892
            %v894 = vld [vmem:[%s500 + $0x310] sm:%s493]
            %895 = vst [vmem:[%s501 + $0x310] sm:%s493] %v894
            %v896 = vld [vmem:[%s500 + $0x318] sm:%s493]
            %897 = vst [vmem:[%s501 + $0x314] sm:%s493] %v896
            %v898 = vld [vmem:[%s500 + $0x314] sm:%s493]
            %899 = vst [vmem:[%s501 + $0x318] sm:%s493] %v898
            %v900 = vld [vmem:[%s500 + $0x31c] sm:%s493]
            %901 = vst [vmem:[%s501 + $0x31c] sm:%s493] %v900
            %v902 = vld [vmem:[%s500 + $0x320] sm:%s493]
            %903 = vst [vmem:[%s501 + $0x320] sm:%s493] %v902
            %v904 = vld [vmem:[%s500 + $0x328] sm:%s493]
            %905 = vst [vmem:[%s501 + $0x324] sm:%s493] %v904
            %v906 = vld [vmem:[%s500 + $0x324] sm:%s493]
            %907 = vst [vmem:[%s501 + $0x328] sm:%s493] %v906
            %v908 = vld [vmem:[%s500 + $0x32c] sm:%s493]
            %909 = vst [vmem:[%s501 + $0x32c] sm:%s493] %v908
            %v910 = vld [vmem:[%s500 + $0x330] sm:%s493]
            %911 = vst [vmem:[%s501 + $0x330] sm:%s493] %v910
            %v912 = vld [vmem:[%s500 + $0x338] sm:%s493]
            %913 = vst [vmem:[%s501 + $0x334] sm:%s493] %v912
            %v914 = vld [vmem:[%s500 + $0x334] sm:%s493]
            %915 = vst [vmem:[%s501 + $0x338] sm:%s493] %v914
            %v916 = vld [vmem:[%s500 + $0x33c] sm:%s493]
            %917 = vst [vmem:[%s501 + $0x33c] sm:%s493] %v916
            %v918 = vld [vmem:[%s500 + $0x340] sm:%s493]
            %919 = vst [vmem:[%s501 + $0x340] sm:%s493] %v918
            %v920 = vld [vmem:[%s500 + $0x348] sm:%s493]
            %921 = vst [vmem:[%s501 + $0x344] sm:%s493] %v920
            %v922 = vld [vmem:[%s500 + $0x344] sm:%s493]
            %923 = vst [vmem:[%s501 + $0x348] sm:%s493] %v922
            %v924 = vld [vmem:[%s500 + $0x34c] sm:%s493]
            %925 = vst [vmem:[%s501 + $0x34c] sm:%s493] %v924
            %v926 = vld [vmem:[%s500 + $0x350] sm:%s493]
            %927 = vst [vmem:[%s501 + $0x350] sm:%s493] %v926
            %v928 = vld [vmem:[%s500 + $0x358] sm:%s493]
            %929 = vst [vmem:[%s501 + $0x354] sm:%s493] %v928
            %v930 = vld [vmem:[%s500 + $0x354] sm:%s493]
            %931 = vst [vmem:[%s501 + $0x358] sm:%s493] %v930
            %v932 = vld [vmem:[%s500 + $0x35c] sm:%s493]
            %933 = vst [vmem:[%s501 + $0x35c] sm:%s493] %v932
          $region57: #{rot_conv2d_forward.1} parent=44 // loop_footer
            %s499 = sadd.s32 1, %s495
          $region58: #{rot_conv2d_forward.1} parent=44 // loop_footer_branch
            %494 = sbr.rel target = $region54
          $region59: #{rot_conv2d_forward.1} parent=44 // loop_exit
            _
        $region45: #{rot_conv2d_forward.1} parent=29 // pred_fallthru
          _
      $region30: #{rot_conv2d_forward.1} parent=26 // pred_fallthru
        _
      // Predicated region
      $region31: #{rot_conv2d_forward.1} parent=26 // pred_check
        %p31 = pneg %p27
      $region32: #{rot_conv2d_forward.1} parent=26 // pred_check_branch
        %33 = sbr.rel (%p31) target = $region34
      $region33: #{rot_conv2d_forward.1} parent=26 // pred_region
        %s34 = sshllo.u32 0, 4
        loop: start=0, step=1, limit=1
        $region35: #{rot_conv2d_forward.1} parent=33 // loop_pre_header
          _
        $region36: #{rot_conv2d_forward.1} parent=33 // loop_header
          %s36 = sphi 0, %s40
          %p37 = scmp.ge.s32.totalorder %s36, 1
          %s41 = sphi %s1, %s1
          %s42 = sphi [#allocation2], [#allocation2]
        $region37: #{rot_conv2d_forward.1} parent=33 // loop_header_branch
          %39 = sbr.rel (%p37) target = $region41
        $region38: #{rot_conv2d_forward.1} parent=33 // loop_body
          %v43 = vld [vmem:[%s41] sm:%s34]
          %44 = vst [vmem:[%s42] sm:%s34] %v43
          %v45 = vld [vmem:[%s41 + $0x8] sm:%s34]
          %46 = vst [vmem:[%s42 + $0x4] sm:%s34] %v45
          %v47 = vld [vmem:[%s41 + $0x4] sm:%s34]
          %48 = vst [vmem:[%s42 + $0x8] sm:%s34] %v47
          %v49 = vld [vmem:[%s41 + $0xc] sm:%s34]
          %50 = vst [vmem:[%s42 + $0xc] sm:%s34] %v49
          %v51 = vld [vmem:[%s41 + $0x10] sm:%s34]
          %52 = vst [vmem:[%s42 + $0x10] sm:%s34] %v51
          %v53 = vld [vmem:[%s41 + $0x18] sm:%s34]
          %54 = vst [vmem:[%s42 + $0x14] sm:%s34] %v53
          %v55 = vld [vmem:[%s41 + $0x14] sm:%s34]
          %56 = vst [vmem:[%s42 + $0x18] sm:%s34] %v55
          %v57 = vld [vmem:[%s41 + $0x1c] sm:%s34]
          %58 = vst [vmem:[%s42 + $0x1c] sm:%s34] %v57
          %v59 = vld [vmem:[%s41 + $0x20] sm:%s34]
          %60 = vst [vmem:[%s42 + $0x20] sm:%s34] %v59
          %v61 = vld [vmem:[%s41 + $0x28] sm:%s34]
          %62 = vst [vmem:[%s42 + $0x24] sm:%s34] %v61
          %v63 = vld [vmem:[%s41 + $0x24] sm:%s34]
          %64 = vst [vmem:[%s42 + $0x28] sm:%s34] %v63
          %v65 = vld [vmem:[%s41 + $0x2c] sm:%s34]
          %66 = vst [vmem:[%s42 + $0x2c] sm:%s34] %v65
          %v67 = vld [vmem:[%s41 + $0x30] sm:%s34]
          %68 = vst [vmem:[%s42 + $0x30] sm:%s34] %v67
          %v69 = vld [vmem:[%s41 + $0x38] sm:%s34]
          %70 = vst [vmem:[%s42 + $0x34] sm:%s34] %v69
          %v71 = vld [vmem:[%s41 + $0x34] sm:%s34]
          %72 = vst [vmem:[%s42 + $0x38] sm:%s34] %v71
          %v73 = vld [vmem:[%s41 + $0x3c] sm:%s34]
          %74 = vst [vmem:[%s42 + $0x3c] sm:%s34] %v73
          %v75 = vld [vmem:[%s41 + $0x40] sm:%s34]
          %76 = vst [vmem:[%s42 + $0x40] sm:%s34] %v75
          %v77 = vld [vmem:[%s41 + $0x48] sm:%s34]
          %78 = vst [vmem:[%s42 + $0x44] sm:%s34] %v77
          %v79 = vld [vmem:[%s41 + $0x44] sm:%s34]
          %80 = vst [vmem:[%s42 + $0x48] sm:%s34] %v79
          %v81 = vld [vmem:[%s41 + $0x4c] sm:%s34]
          %82 = vst [vmem:[%s42 + $0x4c] sm:%s34] %v81
          %v83 = vld [vmem:[%s41 + $0x50] sm:%s34]
          %84 = vst [vmem:[%s42 + $0x50] sm:%s34] %v83
          %v85 = vld [vmem:[%s41 + $0x58] sm:%s34]
          %86 = vst [vmem:[%s42 + $0x54] sm:%s34] %v85
          %v87 = vld [vmem:[%s41 + $0x54] sm:%s34]
          %88 = vst [vmem:[%s42 + $0x58] sm:%s34] %v87
          %v89 = vld [vmem:[%s41 + $0x5c] sm:%s34]
          %90 = vst [vmem:[%s42 + $0x5c] sm:%s34] %v89
          %v91 = vld [vmem:[%s41 + $0x60] sm:%s34]
          %92 = vst [vmem:[%s42 + $0x60] sm:%s34] %v91
          %v93 = vld [vmem:[%s41 + $0x68] sm:%s34]
          %94 = vst [vmem:[%s42 + $0x64] sm:%s34] %v93
          %v95 = vld [vmem:[%s41 + $0x64] sm:%s34]
          %96 = vst [vmem:[%s42 + $0x68] sm:%s34] %v95
          %v97 = vld [vmem:[%s41 + $0x6c] sm:%s34]
          %98 = vst [vmem:[%s42 + $0x6c] sm:%s34] %v97
          %v99 = vld [vmem:[%s41 + $0x70] sm:%s34]
          %100 = vst [vmem:[%s42 + $0x70] sm:%s34] %v99
          %v101 = vld [vmem:[%s41 + $0x78] sm:%s34]
          %102 = vst [vmem:[%s42 + $0x74] sm:%s34] %v101
          %v103 = vld [vmem:[%s41 + $0x74] sm:%s34]
          %104 = vst [vmem:[%s42 + $0x78] sm:%s34] %v103
          %v105 = vld [vmem:[%s41 + $0x7c] sm:%s34]
          %106 = vst [vmem:[%s42 + $0x7c] sm:%s34] %v105
          %v107 = vld [vmem:[%s41 + $0x80] sm:%s34]
          %108 = vst [vmem:[%s42 + $0x80] sm:%s34] %v107
          %v109 = vld [vmem:[%s41 + $0x88] sm:%s34]
          %110 = vst [vmem:[%s42 + $0x84] sm:%s34] %v109
          %v111 = vld [vmem:[%s41 + $0x84] sm:%s34]
          %112 = vst [vmem:[%s42 + $0x88] sm:%s34] %v111
          %v113 = vld [vmem:[%s41 + $0x8c] sm:%s34]
          %114 = vst [vmem:[%s42 + $0x8c] sm:%s34] %v113
          %v115 = vld [vmem:[%s41 + $0x90] sm:%s34]
          %116 = vst [vmem:[%s42 + $0x90] sm:%s34] %v115
          %v117 = vld [vmem:[%s41 + $0x98] sm:%s34]
          %118 = vst [vmem:[%s42 + $0x94] sm:%s34] %v117
          %v119 = vld [vmem:[%s41 + $0x94] sm:%s34]
          %120 = vst [vmem:[%s42 + $0x98] sm:%s34] %v119
          %v121 = vld [vmem:[%s41 + $0x9c] sm:%s34]
          %122 = vst [vmem:[%s42 + $0x9c] sm:%s34] %v121
          %v123 = vld [vmem:[%s41 + $0xa0] sm:%s34]
          %124 = vst [vmem:[%s42 + $0xa0] sm:%s34] %v123
          %v125 = vld [vmem:[%s41 + $0xa8] sm:%s34]
          %126 = vst [vmem:[%s42 + $0xa4] sm:%s34] %v125
          %v127 = vld [vmem:[%s41 + $0xa4] sm:%s34]
          %128 = vst [vmem:[%s42 + $0xa8] sm:%s34] %v127
          %v129 = vld [vmem:[%s41 + $0xac] sm:%s34]
          %130 = vst [vmem:[%s42 + $0xac] sm:%s34] %v129
          %v131 = vld [vmem:[%s41 + $0xb0] sm:%s34]
          %132 = vst [vmem:[%s42 + $0xb0] sm:%s34] %v131
          %v133 = vld [vmem:[%s41 + $0xb8] sm:%s34]
          %134 = vst [vmem:[%s42 + $0xb4] sm:%s34] %v133
          %v135 = vld [vmem:[%s41 + $0xb4] sm:%s34]
          %136 = vst [vmem:[%s42 + $0xb8] sm:%s34] %v135
          %v137 = vld [vmem:[%s41 + $0xbc] sm:%s34]
          %138 = vst [vmem:[%s42 + $0xbc] sm:%s34] %v137
          %v139 = vld [vmem:[%s41 + $0xc0] sm:%s34]
          %140 = vst [vmem:[%s42 + $0xc0] sm:%s34] %v139
          %v141 = vld [vmem:[%s41 + $0xc8] sm:%s34]
          %142 = vst [vmem:[%s42 + $0xc4] sm:%s34] %v141
          %v143 = vld [vmem:[%s41 + $0xc4] sm:%s34]
          %144 = vst [vmem:[%s42 + $0xc8] sm:%s34] %v143
          %v145 = vld [vmem:[%s41 + $0xcc] sm:%s34]
          %146 = vst [vmem:[%s42 + $0xcc] sm:%s34] %v145
          %v147 = vld [vmem:[%s41 + $0xd0] sm:%s34]
          %148 = vst [vmem:[%s42 + $0xd0] sm:%s34] %v147
          %v149 = vld [vmem:[%s41 + $0xd8] sm:%s34]
          %150 = vst [vmem:[%s42 + $0xd4] sm:%s34] %v149
          %v151 = vld [vmem:[%s41 + $0xd4] sm:%s34]
          %152 = vst [vmem:[%s42 + $0xd8] sm:%s34] %v151
          %v153 = vld [vmem:[%s41 + $0xdc] sm:%s34]
          %154 = vst [vmem:[%s42 + $0xdc] sm:%s34] %v153
          %v155 = vld [vmem:[%s41 + $0xe0] sm:%s34]
          %156 = vst [vmem:[%s42 + $0xe0] sm:%s34] %v155
          %v157 = vld [vmem:[%s41 + $0xe8] sm:%s34]
          %158 = vst [vmem:[%s42 + $0xe4] sm:%s34] %v157
          %v159 = vld [vmem:[%s41 + $0xe4] sm:%s34]
          %160 = vst [vmem:[%s42 + $0xe8] sm:%s34] %v159
          %v161 = vld [vmem:[%s41 + $0xec] sm:%s34]
          %162 = vst [vmem:[%s42 + $0xec] sm:%s34] %v161
          %v163 = vld [vmem:[%s41 + $0xf0] sm:%s34]
          %164 = vst [vmem:[%s42 + $0xf0] sm:%s34] %v163
          %v165 = vld [vmem:[%s41 + $0xf8] sm:%s34]
          %166 = vst [vmem:[%s42 + $0xf4] sm:%s34] %v165
          %v167 = vld [vmem:[%s41 + $0xf4] sm:%s34]
          %168 = vst [vmem:[%s42 + $0xf8] sm:%s34] %v167
          %v169 = vld [vmem:[%s41 + $0xfc] sm:%s34]
          %170 = vst [vmem:[%s42 + $0xfc] sm:%s34] %v169
          %v171 = vld [vmem:[%s41 + $0x100] sm:%s34]
          %172 = vst [vmem:[%s42 + $0x100] sm:%s34] %v171
          %v173 = vld [vmem:[%s41 + $0x108] sm:%s34]
          %174 = vst [vmem:[%s42 + $0x104] sm:%s34] %v173
          %v175 = vld [vmem:[%s41 + $0x104] sm:%s34]
          %176 = vst [vmem:[%s42 + $0x108] sm:%s34] %v175
          %v177 = vld [vmem:[%s41 + $0x10c] sm:%s34]
          %178 = vst [vmem:[%s42 + $0x10c] sm:%s34] %v177
          %v179 = vld [vmem:[%s41 + $0x110] sm:%s34]
          %180 = vst [vmem:[%s42 + $0x110] sm:%s34] %v179
          %v181 = vld [vmem:[%s41 + $0x118] sm:%s34]
          %182 = vst [vmem:[%s42 + $0x114] sm:%s34] %v181
          %v183 = vld [vmem:[%s41 + $0x114] sm:%s34]
          %184 = vst [vmem:[%s42 + $0x118] sm:%s34] %v183
          %v185 = vld [vmem:[%s41 + $0x11c] sm:%s34]
          %186 = vst [vmem:[%s42 + $0x11c] sm:%s34] %v185
          %v187 = vld [vmem:[%s41 + $0x120] sm:%s34]
          %188 = vst [vmem:[%s42 + $0x120] sm:%s34] %v187
          %v189 = vld [vmem:[%s41 + $0x128] sm:%s34]
          %190 = vst [vmem:[%s42 + $0x124] sm:%s34] %v189
          %v191 = vld [vmem:[%s41 + $0x124] sm:%s34]
          %192 = vst [vmem:[%s42 + $0x128] sm:%s34] %v191
          %v193 = vld [vmem:[%s41 + $0x12c] sm:%s34]
          %194 = vst [vmem:[%s42 + $0x12c] sm:%s34] %v193
          %v195 = vld [vmem:[%s41 + $0x130] sm:%s34]
          %196 = vst [vmem:[%s42 + $0x130] sm:%s34] %v195
          %v197 = vld [vmem:[%s41 + $0x138] sm:%s34]
          %198 = vst [vmem:[%s42 + $0x134] sm:%s34] %v197
          %v199 = vld [vmem:[%s41 + $0x134] sm:%s34]
          %200 = vst [vmem:[%s42 + $0x138] sm:%s34] %v199
          %v201 = vld [vmem:[%s41 + $0x13c] sm:%s34]
          %202 = vst [vmem:[%s42 + $0x13c] sm:%s34] %v201
          %v203 = vld [vmem:[%s41 + $0x140] sm:%s34]
          %204 = vst [vmem:[%s42 + $0x140] sm:%s34] %v203
          %v205 = vld [vmem:[%s41 + $0x148] sm:%s34]
          %206 = vst [vmem:[%s42 + $0x144] sm:%s34] %v205
          %v207 = vld [vmem:[%s41 + $0x144] sm:%s34]
          %208 = vst [vmem:[%s42 + $0x148] sm:%s34] %v207
          %v209 = vld [vmem:[%s41 + $0x14c] sm:%s34]
          %210 = vst [vmem:[%s42 + $0x14c] sm:%s34] %v209
          %v211 = vld [vmem:[%s41 + $0x150] sm:%s34]
          %212 = vst [vmem:[%s42 + $0x150] sm:%s34] %v211
          %v213 = vld [vmem:[%s41 + $0x158] sm:%s34]
          %214 = vst [vmem:[%s42 + $0x154] sm:%s34] %v213
          %v215 = vld [vmem:[%s41 + $0x154] sm:%s34]
          %216 = vst [vmem:[%s42 + $0x158] sm:%s34] %v215
          %v217 = vld [vmem:[%s41 + $0x15c] sm:%s34]
          %218 = vst [vmem:[%s42 + $0x15c] sm:%s34] %v217
          %v219 = vld [vmem:[%s41 + $0x160] sm:%s34]
          %220 = vst [vmem:[%s42 + $0x160] sm:%s34] %v219
          %v221 = vld [vmem:[%s41 + $0x168] sm:%s34]
          %222 = vst [vmem:[%s42 + $0x164] sm:%s34] %v221
          %v223 = vld [vmem:[%s41 + $0x164] sm:%s34]
          %224 = vst [vmem:[%s42 + $0x168] sm:%s34] %v223
          %v225 = vld [vmem:[%s41 + $0x16c] sm:%s34]
          %226 = vst [vmem:[%s42 + $0x16c] sm:%s34] %v225
          %v227 = vld [vmem:[%s41 + $0x170] sm:%s34]
          %228 = vst [vmem:[%s42 + $0x170] sm:%s34] %v227
          %v229 = vld [vmem:[%s41 + $0x178] sm:%s34]
          %230 = vst [vmem:[%s42 + $0x174] sm:%s34] %v229
          %v231 = vld [vmem:[%s41 + $0x174] sm:%s34]
          %232 = vst [vmem:[%s42 + $0x178] sm:%s34] %v231
          %v233 = vld [vmem:[%s41 + $0x17c] sm:%s34]
          %234 = vst [vmem:[%s42 + $0x17c] sm:%s34] %v233
          %v235 = vld [vmem:[%s41 + $0x180] sm:%s34]
          %236 = vst [vmem:[%s42 + $0x180] sm:%s34] %v235
          %v237 = vld [vmem:[%s41 + $0x188] sm:%s34]
          %238 = vst [vmem:[%s42 + $0x184] sm:%s34] %v237
          %v239 = vld [vmem:[%s41 + $0x184] sm:%s34]
          %240 = vst [vmem:[%s42 + $0x188] sm:%s34] %v239
          %v241 = vld [vmem:[%s41 + $0x18c] sm:%s34]
          %242 = vst [vmem:[%s42 + $0x18c] sm:%s34] %v241
          %v243 = vld [vmem:[%s41 + $0x190] sm:%s34]
          %244 = vst [vmem:[%s42 + $0x190] sm:%s34] %v243
          %v245 = vld [vmem:[%s41 + $0x198] sm:%s34]
          %246 = vst [vmem:[%s42 + $0x194] sm:%s34] %v245
          %v247 = vld [vmem:[%s41 + $0x194] sm:%s34]
          %248 = vst [vmem:[%s42 + $0x198] sm:%s34] %v247
          %v249 = vld [vmem:[%s41 + $0x19c] sm:%s34]
          %250 = vst [vmem:[%s42 + $0x19c] sm:%s34] %v249
          %v251 = vld [vmem:[%s41 + $0x1a0] sm:%s34]
          %252 = vst [vmem:[%s42 + $0x1a0] sm:%s34] %v251
          %v253 = vld [vmem:[%s41 + $0x1a8] sm:%s34]
          %254 = vst [vmem:[%s42 + $0x1a4] sm:%s34] %v253
          %v255 = vld [vmem:[%s41 + $0x1a4] sm:%s34]
          %256 = vst [vmem:[%s42 + $0x1a8] sm:%s34] %v255
          %v257 = vld [vmem:[%s41 + $0x1ac] sm:%s34]
          %258 = vst [vmem:[%s42 + $0x1ac] sm:%s34] %v257
          %v259 = vld [vmem:[%s41 + $0x1b0] sm:%s34]
          %260 = vst [vmem:[%s42 + $0x1b0] sm:%s34] %v259
          %v261 = vld [vmem:[%s41 + $0x1b8] sm:%s34]
          %262 = vst [vmem:[%s42 + $0x1b4] sm:%s34] %v261
          %v263 = vld [vmem:[%s41 + $0x1b4] sm:%s34]
          %264 = vst [vmem:[%s42 + $0x1b8] sm:%s34] %v263
          %v265 = vld [vmem:[%s41 + $0x1bc] sm:%s34]
          %266 = vst [vmem:[%s42 + $0x1bc] sm:%s34] %v265
          %v267 = vld [vmem:[%s41 + $0x1c0] sm:%s34]
          %268 = vst [vmem:[%s42 + $0x1c0] sm:%s34] %v267
          %v269 = vld [vmem:[%s41 + $0x1c8] sm:%s34]
          %270 = vst [vmem:[%s42 + $0x1c4] sm:%s34] %v269
          %v271 = vld [vmem:[%s41 + $0x1c4] sm:%s34]
          %272 = vst [vmem:[%s42 + $0x1c8] sm:%s34] %v271
          %v273 = vld [vmem:[%s41 + $0x1cc] sm:%s34]
          %274 = vst [vmem:[%s42 + $0x1cc] sm:%s34] %v273
          %v275 = vld [vmem:[%s41 + $0x1d0] sm:%s34]
          %276 = vst [vmem:[%s42 + $0x1d0] sm:%s34] %v275
          %v277 = vld [vmem:[%s41 + $0x1d8] sm:%s34]
          %278 = vst [vmem:[%s42 + $0x1d4] sm:%s34] %v277
          %v279 = vld [vmem:[%s41 + $0x1d4] sm:%s34]
          %280 = vst [vmem:[%s42 + $0x1d8] sm:%s34] %v279
          %v281 = vld [vmem:[%s41 + $0x1dc] sm:%s34]
          %282 = vst [vmem:[%s42 + $0x1dc] sm:%s34] %v281
          %v283 = vld [vmem:[%s41 + $0x1e0] sm:%s34]
          %284 = vst [vmem:[%s42 + $0x1e0] sm:%s34] %v283
          %v285 = vld [vmem:[%s41 + $0x1e8] sm:%s34]
          %286 = vst [vmem:[%s42 + $0x1e4] sm:%s34] %v285
          %v287 = vld [vmem:[%s41 + $0x1e4] sm:%s34]
          %288 = vst [vmem:[%s42 + $0x1e8] sm:%s34] %v287
          %v289 = vld [vmem:[%s41 + $0x1ec] sm:%s34]
          %290 = vst [vmem:[%s42 + $0x1ec] sm:%s34] %v289
          %v291 = vld [vmem:[%s41 + $0x1f0] sm:%s34]
          %292 = vst [vmem:[%s42 + $0x1f0] sm:%s34] %v291
          %v293 = vld [vmem:[%s41 + $0x1f8] sm:%s34]
          %294 = vst [vmem:[%s42 + $0x1f4] sm:%s34] %v293
          %v295 = vld [vmem:[%s41 + $0x1f4] sm:%s34]
          %296 = vst [vmem:[%s42 + $0x1f8] sm:%s34] %v295
          %v297 = vld [vmem:[%s41 + $0x1fc] sm:%s34]
          %298 = vst [vmem:[%s42 + $0x1fc] sm:%s34] %v297
          %v299 = vld [vmem:[%s41 + $0x200] sm:%s34]
          %300 = vst [vmem:[%s42 + $0x200] sm:%s34] %v299
          %v301 = vld [vmem:[%s41 + $0x208] sm:%s34]
          %302 = vst [vmem:[%s42 + $0x204] sm:%s34] %v301
          %v303 = vld [vmem:[%s41 + $0x204] sm:%s34]
          %304 = vst [vmem:[%s42 + $0x208] sm:%s34] %v303
          %v305 = vld [vmem:[%s41 + $0x20c] sm:%s34]
          %306 = vst [vmem:[%s42 + $0x20c] sm:%s34] %v305
          %v307 = vld [vmem:[%s41 + $0x210] sm:%s34]
          %308 = vst [vmem:[%s42 + $0x210] sm:%s34] %v307
          %v309 = vld [vmem:[%s41 + $0x218] sm:%s34]
          %310 = vst [vmem:[%s42 + $0x214] sm:%s34] %v309
          %v311 = vld [vmem:[%s41 + $0x214] sm:%s34]
          %312 = vst [vmem:[%s42 + $0x218] sm:%s34] %v311
          %v313 = vld [vmem:[%s41 + $0x21c] sm:%s34]
          %314 = vst [vmem:[%s42 + $0x21c] sm:%s34] %v313
          %v315 = vld [vmem:[%s41 + $0x220] sm:%s34]
          %316 = vst [vmem:[%s42 + $0x220] sm:%s34] %v315
          %v317 = vld [vmem:[%s41 + $0x228] sm:%s34]
          %318 = vst [vmem:[%s42 + $0x224] sm:%s34] %v317
          %v319 = vld [vmem:[%s41 + $0x224] sm:%s34]
          %320 = vst [vmem:[%s42 + $0x228] sm:%s34] %v319
          %v321 = vld [vmem:[%s41 + $0x22c] sm:%s34]
          %322 = vst [vmem:[%s42 + $0x22c] sm:%s34] %v321
          %v323 = vld [vmem:[%s41 + $0x230] sm:%s34]
          %324 = vst [vmem:[%s42 + $0x230] sm:%s34] %v323
          %v325 = vld [vmem:[%s41 + $0x238] sm:%s34]
          %326 = vst [vmem:[%s42 + $0x234] sm:%s34] %v325
          %v327 = vld [vmem:[%s41 + $0x234] sm:%s34]
          %328 = vst [vmem:[%s42 + $0x238] sm:%s34] %v327
          %v329 = vld [vmem:[%s41 + $0x23c] sm:%s34]
          %330 = vst [vmem:[%s42 + $0x23c] sm:%s34] %v329
          %v331 = vld [vmem:[%s41 + $0x240] sm:%s34]
          %332 = vst [vmem:[%s42 + $0x240] sm:%s34] %v331
          %v333 = vld [vmem:[%s41 + $0x248] sm:%s34]
          %334 = vst [vmem:[%s42 + $0x244] sm:%s34] %v333
          %v335 = vld [vmem:[%s41 + $0x244] sm:%s34]
          %336 = vst [vmem:[%s42 + $0x248] sm:%s34] %v335
          %v337 = vld [vmem:[%s41 + $0x24c] sm:%s34]
          %338 = vst [vmem:[%s42 + $0x24c] sm:%s34] %v337
          %v339 = vld [vmem:[%s41 + $0x250] sm:%s34]
          %340 = vst [vmem:[%s42 + $0x250] sm:%s34] %v339
          %v341 = vld [vmem:[%s41 + $0x258] sm:%s34]
          %342 = vst [vmem:[%s42 + $0x254] sm:%s34] %v341
          %v343 = vld [vmem:[%s41 + $0x254] sm:%s34]
          %344 = vst [vmem:[%s42 + $0x258] sm:%s34] %v343
          %v345 = vld [vmem:[%s41 + $0x25c] sm:%s34]
          %346 = vst [vmem:[%s42 + $0x25c] sm:%s34] %v345
          %v347 = vld [vmem:[%s41 + $0x260] sm:%s34]
          %348 = vst [vmem:[%s42 + $0x260] sm:%s34] %v347
          %v349 = vld [vmem:[%s41 + $0x268] sm:%s34]
          %350 = vst [vmem:[%s42 + $0x264] sm:%s34] %v349
          %v351 = vld [vmem:[%s41 + $0x264] sm:%s34]
          %352 = vst [vmem:[%s42 + $0x268] sm:%s34] %v351
          %v353 = vld [vmem:[%s41 + $0x26c] sm:%s34]
          %354 = vst [vmem:[%s42 + $0x26c] sm:%s34] %v353
          %v355 = vld [vmem:[%s41 + $0x270] sm:%s34]
          %356 = vst [vmem:[%s42 + $0x270] sm:%s34] %v355
          %v357 = vld [vmem:[%s41 + $0x278] sm:%s34]
          %358 = vst [vmem:[%s42 + $0x274] sm:%s34] %v357
          %v359 = vld [vmem:[%s41 + $0x274] sm:%s34]
          %360 = vst [vmem:[%s42 + $0x278] sm:%s34] %v359
          %v361 = vld [vmem:[%s41 + $0x27c] sm:%s34]
          %362 = vst [vmem:[%s42 + $0x27c] sm:%s34] %v361
          %v363 = vld [vmem:[%s41 + $0x280] sm:%s34]
          %364 = vst [vmem:[%s42 + $0x280] sm:%s34] %v363
          %v365 = vld [vmem:[%s41 + $0x288] sm:%s34]
          %366 = vst [vmem:[%s42 + $0x284] sm:%s34] %v365
          %v367 = vld [vmem:[%s41 + $0x284] sm:%s34]
          %368 = vst [vmem:[%s42 + $0x288] sm:%s34] %v367
          %v369 = vld [vmem:[%s41 + $0x28c] sm:%s34]
          %370 = vst [vmem:[%s42 + $0x28c] sm:%s34] %v369
          %v371 = vld [vmem:[%s41 + $0x290] sm:%s34]
          %372 = vst [vmem:[%s42 + $0x290] sm:%s34] %v371
          %v373 = vld [vmem:[%s41 + $0x298] sm:%s34]
          %374 = vst [vmem:[%s42 + $0x294] sm:%s34] %v373
          %v375 = vld [vmem:[%s41 + $0x294] sm:%s34]
          %376 = vst [vmem:[%s42 + $0x298] sm:%s34] %v375
          %v377 = vld [vmem:[%s41 + $0x29c] sm:%s34]
          %378 = vst [vmem:[%s42 + $0x29c] sm:%s34] %v377
          %v379 = vld [vmem:[%s41 + $0x2a0] sm:%s34]
          %380 = vst [vmem:[%s42 + $0x2a0] sm:%s34] %v379
          %v381 = vld [vmem:[%s41 + $0x2a8] sm:%s34]
          %382 = vst [vmem:[%s42 + $0x2a4] sm:%s34] %v381
          %v383 = vld [vmem:[%s41 + $0x2a4] sm:%s34]
          %384 = vst [vmem:[%s42 + $0x2a8] sm:%s34] %v383
          %v385 = vld [vmem:[%s41 + $0x2ac] sm:%s34]
          %386 = vst [vmem:[%s42 + $0x2ac] sm:%s34] %v385
          %v387 = vld [vmem:[%s41 + $0x2b0] sm:%s34]
          %388 = vst [vmem:[%s42 + $0x2b0] sm:%s34] %v387
          %v389 = vld [vmem:[%s41 + $0x2b8] sm:%s34]
          %390 = vst [vmem:[%s42 + $0x2b4] sm:%s34] %v389
          %v391 = vld [vmem:[%s41 + $0x2b4] sm:%s34]
          %392 = vst [vmem:[%s42 + $0x2b8] sm:%s34] %v391
          %v393 = vld [vmem:[%s41 + $0x2bc] sm:%s34]
          %394 = vst [vmem:[%s42 + $0x2bc] sm:%s34] %v393
          %v395 = vld [vmem:[%s41 + $0x2c0] sm:%s34]
          %396 = vst [vmem:[%s42 + $0x2c0] sm:%s34] %v395
          %v397 = vld [vmem:[%s41 + $0x2c8] sm:%s34]
          %398 = vst [vmem:[%s42 + $0x2c4] sm:%s34] %v397
          %v399 = vld [vmem:[%s41 + $0x2c4] sm:%s34]
          %400 = vst [vmem:[%s42 + $0x2c8] sm:%s34] %v399
          %v401 = vld [vmem:[%s41 + $0x2cc] sm:%s34]
          %402 = vst [vmem:[%s42 + $0x2cc] sm:%s34] %v401
          %v403 = vld [vmem:[%s41 + $0x2d0] sm:%s34]
          %404 = vst [vmem:[%s42 + $0x2d0] sm:%s34] %v403
          %v405 = vld [vmem:[%s41 + $0x2d8] sm:%s34]
          %406 = vst [vmem:[%s42 + $0x2d4] sm:%s34] %v405
          %v407 = vld [vmem:[%s41 + $0x2d4] sm:%s34]
          %408 = vst [vmem:[%s42 + $0x2d8] sm:%s34] %v407
          %v409 = vld [vmem:[%s41 + $0x2dc] sm:%s34]
          %410 = vst [vmem:[%s42 + $0x2dc] sm:%s34] %v409
          %v411 = vld [vmem:[%s41 + $0x2e0] sm:%s34]
          %412 = vst [vmem:[%s42 + $0x2e0] sm:%s34] %v411
          %v413 = vld [vmem:[%s41 + $0x2e8] sm:%s34]
          %414 = vst [vmem:[%s42 + $0x2e4] sm:%s34] %v413
          %v415 = vld [vmem:[%s41 + $0x2e4] sm:%s34]
          %416 = vst [vmem:[%s42 + $0x2e8] sm:%s34] %v415
          %v417 = vld [vmem:[%s41 + $0x2ec] sm:%s34]
          %418 = vst [vmem:[%s42 + $0x2ec] sm:%s34] %v417
          %v419 = vld [vmem:[%s41 + $0x2f0] sm:%s34]
          %420 = vst [vmem:[%s42 + $0x2f0] sm:%s34] %v419
          %v421 = vld [vmem:[%s41 + $0x2f8] sm:%s34]
          %422 = vst [vmem:[%s42 + $0x2f4] sm:%s34] %v421
          %v423 = vld [vmem:[%s41 + $0x2f4] sm:%s34]
          %424 = vst [vmem:[%s42 + $0x2f8] sm:%s34] %v423
          %v425 = vld [vmem:[%s41 + $0x2fc] sm:%s34]
          %426 = vst [vmem:[%s42 + $0x2fc] sm:%s34] %v425
          %v427 = vld [vmem:[%s41 + $0x300] sm:%s34]
          %428 = vst [vmem:[%s42 + $0x300] sm:%s34] %v427
          %v429 = vld [vmem:[%s41 + $0x308] sm:%s34]
          %430 = vst [vmem:[%s42 + $0x304] sm:%s34] %v429
          %v431 = vld [vmem:[%s41 + $0x304] sm:%s34]
          %432 = vst [vmem:[%s42 + $0x308] sm:%s34] %v431
          %v433 = vld [vmem:[%s41 + $0x30c] sm:%s34]
          %434 = vst [vmem:[%s42 + $0x30c] sm:%s34] %v433
          %v435 = vld [vmem:[%s41 + $0x310] sm:%s34]
          %436 = vst [vmem:[%s42 + $0x310] sm:%s34] %v435
          %v437 = vld [vmem:[%s41 + $0x318] sm:%s34]
          %438 = vst [vmem:[%s42 + $0x314] sm:%s34] %v437
          %v439 = vld [vmem:[%s41 + $0x314] sm:%s34]
          %440 = vst [vmem:[%s42 + $0x318] sm:%s34] %v439
          %v441 = vld [vmem:[%s41 + $0x31c] sm:%s34]
          %442 = vst [vmem:[%s42 + $0x31c] sm:%s34] %v441
          %v443 = vld [vmem:[%s41 + $0x320] sm:%s34]
          %444 = vst [vmem:[%s42 + $0x320] sm:%s34] %v443
          %v445 = vld [vmem:[%s41 + $0x328] sm:%s34]
          %446 = vst [vmem:[%s42 + $0x324] sm:%s34] %v445
          %v447 = vld [vmem:[%s41 + $0x324] sm:%s34]
          %448 = vst [vmem:[%s42 + $0x328] sm:%s34] %v447
          %v449 = vld [vmem:[%s41 + $0x32c] sm:%s34]
          %450 = vst [vmem:[%s42 + $0x32c] sm:%s34] %v449
          %v451 = vld [vmem:[%s41 + $0x330] sm:%s34]
          %452 = vst [vmem:[%s42 + $0x330] sm:%s34] %v451
          %v453 = vld [vmem:[%s41 + $0x338] sm:%s34]
          %454 = vst [vmem:[%s42 + $0x334] sm:%s34] %v453
          %v455 = vld [vmem:[%s41 + $0x334] sm:%s34]
          %456 = vst [vmem:[%s42 + $0x338] sm:%s34] %v455
          %v457 = vld [vmem:[%s41 + $0x33c] sm:%s34]
          %458 = vst [vmem:[%s42 + $0x33c] sm:%s34] %v457
          %v459 = vld [vmem:[%s41 + $0x340] sm:%s34]
          %460 = vst [vmem:[%s42 + $0x340] sm:%s34] %v459
          %v461 = vld [vmem:[%s41 + $0x348] sm:%s34]
          %462 = vst [vmem:[%s42 + $0x344] sm:%s34] %v461
          %v463 = vld [vmem:[%s41 + $0x344] sm:%s34]
          %464 = vst [vmem:[%s42 + $0x348] sm:%s34] %v463
          %v465 = vld [vmem:[%s41 + $0x34c] sm:%s34]
          %466 = vst [vmem:[%s42 + $0x34c] sm:%s34] %v465
          %v467 = vld [vmem:[%s41 + $0x350] sm:%s34]
          %468 = vst [vmem:[%s42 + $0x350] sm:%s34] %v467
          %v469 = vld [vmem:[%s41 + $0x358] sm:%s34]
          %470 = vst [vmem:[%s42 + $0x354] sm:%s34] %v469
          %v471 = vld [vmem:[%s41 + $0x354] sm:%s34]
          %472 = vst [vmem:[%s42 + $0x358] sm:%s34] %v471
          %v473 = vld [vmem:[%s41 + $0x35c] sm:%s34]
          %474 = vst [vmem:[%s42 + $0x35c] sm:%s34] %v473
        $region39: #{rot_conv2d_forward.1} parent=33 // loop_footer
          %s40 = sadd.s32 1, %s36
        $region40: #{rot_conv2d_forward.1} parent=33 // loop_footer_branch
          %35 = sbr.rel target = $region36
        $region41: #{rot_conv2d_forward.1} parent=33 // loop_exit
          _
      $region34: #{rot_conv2d_forward.1} parent=26 // pred_fallthru
        _
      // Predicated region
      $region60: #{rot_conv2d_forward.1} parent=26 // pred_check
        _
      $region61: #{rot_conv2d_forward.1} parent=26 // pred_check_branch
        %936 = sbr.rel (0) target = $region63
      $region62: #{rot_conv2d_forward.1} parent=26 // pred_region
        %937 = vsyncadd [#allocation5], 13824
      $region63: #{rot_conv2d_forward.1} parent=26 // pred_fallthru
        _
      %s938 = smul.u32 4, 3
      %s939 = smul.u32 %s938, 36
      %s940 = smul.u32 %s939, 2
      %s941 = sshll.u32 %s940, 4
      %942 = dma.done [#allocation5], %s941
    %v943 = vlaneseq
    %vm944 = vcmp.ge.s32.totalorder %v943, 0
    %vm945 = vcmp.lt.s32.totalorder %v943, 256
    %vm946 = vmand %vm944, %vm945
    %947 = vst.msk [vmem:[#allocation3] sm:$0x3] %vm946, 0.0
    %948 = vst.msk [vmem:[#allocation4] sm:$0x3] %vm946, 0.0
  $region25: #{rot_conv2d_forward.1} parent=0 // pred_fallthru
    _
  %v949 = vld [vmem:[%s0] sm:$0xff]
  %v950 = vld [vmem:[%s0 + $0x8] sm:$0xf]
  %v951 = vld [vmem:[%s0 + $0xc] sm:$0xff]
  %v952 = vld [vmem:[%s0 + $0x14] sm:$0xf]
  %v953 = vld [vmem:[%s0 + $0x18] sm:$0x11]
  %v954 = vld [vmem:[%s0 + $0x20] sm:$0x1]
  %v955 = vld [vmem:[%s0 + $0x24] sm:$0xff]
  %v956 = vld [vmem:[%s0 + $0x2c] sm:$0xf]
  %v957 = vld [vmem:[%s0 + $0x30] sm:$0xff]
  %v958 = vld [vmem:[%s0 + $0x38] sm:$0xf]
  %v959 = vld [vmem:[%s0 + $0x3c] sm:$0x11]
  %v960 = vld [vmem:[%s0 + $0x44] sm:$0x1]
  %v961 = vld [vmem:[#allocation2] sm:$0xff]
  %v962 = vld [vmem:[#allocation2 + $0x8] sm:$0xff]
  %v963 = vld [vmem:[#allocation2 + $0x10] sm:$0xff]
  %v964 = vld [vmem:[#allocation2 + $0x18] sm:$0xff]
  %v965 = vld [vmem:[#allocation2 + $0x20] sm:$0xff]
  %v966 = vld [vmem:[#allocation2 + $0x28] sm:$0xff]
  %v967 = vld [vmem:[#allocation2 + $0x30] sm:$0xff]
  %v968 = vld [vmem:[#allocation2 + $0x38] sm:$0xff]
  %v969 = vld [vmem:[#allocation2 + $0x40] sm:$0xff]
  %v970 = vld [vmem:[#allocation2 + $0x48] sm:$0xff]
  %v971 = vld [vmem:[#allocation2 + $0x50] sm:$0xff]
  %v972 = vld [vmem:[#allocation2 + $0x58] sm:$0xff]
  %v973 = vld [vmem:[#allocation2 + $0x60] sm:$0xff]
  %v974 = vld [vmem:[#allocation2 + $0x68] sm:$0xff]
  %v975 = vld [vmem:[#allocation2 + $0x70] sm:$0xff]
  %v976 = vld [vmem:[#allocation2 + $0x78] sm:$0xff]
  %v977 = vld [vmem:[#allocation2 + $0x80] sm:$0xff]
  %v978 = vld [vmem:[#allocation2 + $0x88] sm:$0xff]
  %v979 = vld [vmem:[#allocation2 + $0x90] sm:$0xff]
  %v980 = vld [vmem:[#allocation2 + $0x98] sm:$0xff]
  %v981 = vld [vmem:[#allocation2 + $0xa0] sm:$0xff]
  %v982 = vld [vmem:[#allocation2 + $0xa8] sm:$0xff]
  %v983 = vld [vmem:[#allocation2 + $0xb0] sm:$0xff]
  %v984 = vld [vmem:[#allocation2 + $0xb8] sm:$0xff]
  %v985 = vld [vmem:[#allocation2 + $0xc0] sm:$0xff]
  %v986 = vld [vmem:[#allocation2 + $0xc8] sm:$0xff]
  %v987 = vld [vmem:[#allocation2 + $0xd0] sm:$0xff]
  %v988 = vld [vmem:[#allocation2 + $0xd8] sm:$0xff]
  %v989 = vld [vmem:[#allocation2 + $0xe0] sm:$0xff]
  %v990 = vld [vmem:[#allocation2 + $0xe8] sm:$0xff]
  %v991 = vld [vmem:[#allocation2 + $0xf0] sm:$0xff]
  %v992 = vld [vmem:[#allocation2 + $0xf8] sm:$0xff]
  %v993 = vld [vmem:[#allocation2 + $0x100] sm:$0xff]
  %v994 = vld [vmem:[#allocation2 + $0x108] sm:$0xff]
  %v995 = vld [vmem:[#allocation2 + $0x110] sm:$0xff]
  %v996 = vld [vmem:[#allocation2 + $0x118] sm:$0xff]
  %vm997 = vsmask.f32 3328
  %vm998 = vsmask.f32 7440
  %vm999 = vmor %vm997, %vm998
  %v1001 = vshrl.u32 %v949, 16
  %v1003 = vrot.slane %v1001, 4
  %v1004 = vshll.u32 %v949, 16
  %v1006 = vrot.slane %v1004, 5
  %v1007 = vor.u32 %v1003, %v1006
  %v1008 = vrot.slane %v1007, 4
  %v1010 = vshll.u32 %v951, 16
  %v1012 = vrot.slane %v1010, 5
  %v1013 = vsel %vm999, %v1008, %v1012
  %v1015 = vshrl.u32 %v950, 16
  %v1017 = vrot.slane %v1015, 4
  %v1018 = vshll.u32 %v950, 16
  %v1020 = vrot.slane %v1018, 5
  %v1021 = vor.u32 %v1017, %v1020
  %v1022 = vrot.slane %v1021, 4
  %v1024 = vshll.u32 %v952, 16
  %v1026 = vrot.slane %v1024, 5
  %v1027 = vsel %vm999, %v1022, %v1026
  %v1028 = vshrl.u32 %v951, 16
  %v1030 = vrot.slane %v1028, 4
  %v1031 = vor.u32 %v1030, %v1012
  %v1032 = vrot.slane %v1031, 4
  %v1034 = vshll.u32 %v953, 16
  %v1036 = vrot.slane %v1034, 5
  %v1037 = vsel %vm999, %v1032, %v1036
  %v1038 = vshrl.u32 %v952, 16
  %v1040 = vrot.slane %v1038, 4
  %v1041 = vor.u32 %v1040, %v1026
  %v1042 = vrot.slane %v1041, 4
  %v1044 = vshll.u32 %v954, 16
  %v1046 = vrot.slane %v1044, 5
  %v1047 = vsel %vm999, %v1042, %v1046
  %v1049 = vshrl.u32 %v955, 16
  %v1051 = vrot.slane %v1049, 4
  %v1052 = vshll.u32 %v955, 16
  %v1054 = vrot.slane %v1052, 5
  %v1055 = vor.u32 %v1051, %v1054
  %v1056 = vrot.slane %v1055, 4
  %v1058 = vshll.u32 %v957, 16
  %v1060 = vrot.slane %v1058, 5
  %v1061 = vsel %vm999, %v1056, %v1060
  %v1063 = vshrl.u32 %v956, 16
  %v1065 = vrot.slane %v1063, 4
  %v1066 = vshll.u32 %v956, 16
  %v1068 = vrot.slane %v1066, 5
  %v1069 = vor.u32 %v1065, %v1068
  %v1070 = vrot.slane %v1069, 4
  %v1072 = vshll.u32 %v958, 16
  %v1074 = vrot.slane %v1072, 5
  %v1075 = vsel %vm999, %v1070, %v1074
  %v1076 = vshrl.u32 %v957, 16
  %v1078 = vrot.slane %v1076, 4
  %v1079 = vor.u32 %v1078, %v1060
  %v1080 = vrot.slane %v1079, 4
  %v1082 = vshll.u32 %v959, 16
  %v1084 = vrot.slane %v1082, 5
  %v1085 = vsel %vm999, %v1080, %v1084
  %v1086 = vshrl.u32 %v958, 16
  %v1088 = vrot.slane %v1086, 4
  %v1089 = vor.u32 %v1088, %v1074
  %v1090 = vrot.slane %v1089, 4
  %v1092 = vshll.u32 %v960, 16
  %v1094 = vrot.slane %v1092, 5
  %v1095 = vsel %vm999, %v1090, %v1094
  %s1096 = scalar_lea.vmem [#allocation2], 288
  %v1097 = vld [vmem:[%s1096] sm:$0xff]
  %v1098 = vld [vmem:[%s1096 + $0x8] sm:$0xff]
  %v1099 = vld [vmem:[%s1096 + $0x10] sm:$0xff]
  %v1100 = vld [vmem:[%s1096 + $0x18] sm:$0xff]
  %v1101 = vld [vmem:[%s1096 + $0x20] sm:$0xff]
  %v1102 = vld [vmem:[%s1096 + $0x28] sm:$0xff]
  %v1103 = vld [vmem:[%s1096 + $0x30] sm:$0xff]
  %v1104 = vld [vmem:[%s1096 + $0x38] sm:$0xff]
  %v1105 = vld [vmem:[%s1096 + $0x40] sm:$0xff]
  %v1106 = vld [vmem:[%s1096 + $0x48] sm:$0xff]
  %v1107 = vld [vmem:[%s1096 + $0x50] sm:$0xff]
  %v1108 = vld [vmem:[%s1096 + $0x58] sm:$0xff]
  %v1109 = vld [vmem:[%s1096 + $0x60] sm:$0xff]
  %v1110 = vld [vmem:[%s1096 + $0x68] sm:$0xff]
  %v1111 = vld [vmem:[%s1096 + $0x70] sm:$0xff]
  %v1112 = vld [vmem:[%s1096 + $0x78] sm:$0xff]
  %v1113 = vld [vmem:[%s1096 + $0x80] sm:$0xff]
  %v1114 = vld [vmem:[%s1096 + $0x88] sm:$0xff]
  %v1115 = vld [vmem:[%s1096 + $0x90] sm:$0xff]
  %v1116 = vld [vmem:[%s1096 + $0x98] sm:$0xff]
  %v1117 = vld [vmem:[%s1096 + $0xa0] sm:$0xff]
  %v1118 = vld [vmem:[%s1096 + $0xa8] sm:$0xff]
  %v1119 = vld [vmem:[%s1096 + $0xb0] sm:$0xff]
  %v1120 = vld [vmem:[%s1096 + $0xb8] sm:$0xff]
  %v1121 = vld [vmem:[%s1096 + $0xc0] sm:$0xff]
  %v1122 = vld [vmem:[%s1096 + $0xc8] sm:$0xff]
  %v1123 = vld [vmem:[%s1096 + $0xd0] sm:$0xff]
  %v1124 = vld [vmem:[%s1096 + $0xd8] sm:$0xff]
  %v1125 = vld [vmem:[%s1096 + $0xe0] sm:$0xff]
  %v1126 = vld [vmem:[%s1096 + $0xe8] sm:$0xff]
  %v1127 = vld [vmem:[%s1096 + $0xf0] sm:$0xff]
  %v1128 = vld [vmem:[%s1096 + $0xf8] sm:$0xff]
  %v1129 = vld [vmem:[%s1096 + $0x100] sm:$0xff]
  %v1130 = vld [vmem:[%s1096 + $0x108] sm:$0xff]
  %v1131 = vld [vmem:[%s1096 + $0x110] sm:$0xff]
  %v1132 = vld [vmem:[%s1096 + $0x118] sm:$0xff]
  %v1133 = vunpack.c.l.b16 %v1013
  %v1134 = vunpack.c.h.b16 %v1013
  %v1135 = vunpack.c.l.b16 %v1027
  %v1136 = vunpack.c.l.b16 %v1037
  %v1137 = vunpack.c.h.b16 %v1037
  %v1138 = vunpack.c.l.b16 %v1047
  %v1139 = vunpack.c.l.b16 %v1061
  %v1140 = vunpack.c.h.b16 %v1061
  %v1141 = vunpack.c.l.b16 %v1075
  %v1142 = vunpack.c.l.b16 %v1085
  %v1143 = vunpack.c.h.b16 %v1085
  %v1144 = vunpack.c.l.b16 %v1095
  %v1145 = vpack.c.b16 %v1136, %v1133
  %v1146 = vpack.c.b16 %v1137, %v1134
  %v1147 = vpack.c.b16 %v1138, %v1135
  %v1148 = vpack.c.b16 %v1142, %v1139
  %v1149 = vpack.c.b16 %v1143, %v1140
  %v1150 = vpack.c.b16 %v1144, %v1141
  %vm1155 = vcmask 261120
  %v1157 = vsel %vm1155, %v1147, 0
  %v1160 = vsel %vm1155, %v1150, 0
  %1162 = vmatprep.subr.bf16.mxu0 %v1098
  %1163 = vmatpush1.bf16.msra.mxu0 %v1097
  %1164 = vmatprep.subr.bf16.mxu0 %v1100
  %1165 = vmatpush1.bf16.msra.mxu0 %v1099
  %1166 = vmatprep.subr.bf16.mxu0 %v1102
  %1167 = vmatpush1.bf16.msra.mxu0 %v1101
  %1168 = vmatprep.subr.bf16.mxu0 %v1104
  %1169 = vmatpush1.bf16.msra.mxu0 %v1103
  %1170 = vmatprep.subr.bf16.mxu0 %v1106
  %1171 = vmatpush1.bf16.msra.mxu0 %v1105
  %1172 = vmatprep.subr.bf16.mxu0 %v1108
  %1173 = vmatpush1.bf16.msra.mxu0 %v1107
  %1174 = vmatprep.subr.bf16.mxu0 %v1110
  %1175 = vmatpush1.bf16.msra.mxu0 %v1109
  %1176 = vmatprep.subr.bf16.mxu0 %v1112
  %1177 = vmatpush1.bf16.msra.mxu0 %v1111
  %1178 = vmatprep.subr.bf16.mxu0 %v1114
  %1179 = vmatpush1.bf16.msra.mxu0 %v1113
  %1180 = vmatprep.subr.bf16.mxu0 %v1116
  %1181 = vmatpush1.bf16.msra.mxu0 %v1115
  %1182 = vmatprep.subr.bf16.mxu0 %v1118
  %1183 = vmatpush1.bf16.msra.mxu0 %v1117
  %1184 = vmatprep.subr.bf16.mxu0 %v1120
  %1185 = vmatpush1.bf16.msra.mxu0 %v1119
  %1186 = vmatprep.subr.bf16.mxu0 %v1122
  %1187 = vmatpush1.bf16.msra.mxu0 %v1121
  %1188 = vmatprep.subr.bf16.mxu0 %v1124
  %1189 = vmatpush1.bf16.msra.mxu0 %v1123
  %1190 = vmatprep.subr.bf16.mxu0 %v1126
  %1191 = vmatpush1.bf16.msra.mxu0 %v1125
  %1192 = vmatprep.subr.bf16.mxu0 %v1128
  %1193 = vmatpush1.bf16.msra.mxu0 %v1127
  %1194 = vmatprep.mubr.bf16.mxu0 %v1146
  %1195 = vmatmul.mubr.bf16.gmra.mrb[0].mxu0 %v1145
  %v1196 = vpop.f32.mrb[0].mxu0
  %v1197 = vadd.f32 0.0, %v1196
  %v1198 = vpop.f32.mrb[0].mxu0
  %v1199 = vadd.f32 0.0, %v1198
  %v1200 = vpop.f32.mrb[0].mxu0
  %v1201 = vadd.f32 0.0, %v1200
  %v1202 = vpop.f32.mrb[0].mxu0
  %v1203 = vadd.f32 0.0, %v1202
  %1204 = vmatprep.mubr.bf16.mxu0 %v1149
  %1205 = vmatmul.mubr.bf16.gmra.mrb[0].mxu0 %v1148
  %v1206 = vpop.f32.mrb[0].mxu0
  %v1207 = vadd.f32 0.0, %v1206
  %v1208 = vpop.f32.mrb[0].mxu0
  %v1209 = vadd.f32 0.0, %v1208
  %v1210 = vpop.f32.mrb[0].mxu0
  %v1211 = vadd.f32 0.0, %v1210
  %v1212 = vpop.f32.mrb[0].mxu0
  %v1213 = vadd.f32 0.0, %v1212
  %1214 = vdwg.mxu0
  %1215 = vmatprep.subr.bf16.mxu0 %v1130
  %1216 = vmatpush1.bf16.msra.mxu0 %v1129
  %1217 = vmatprep.subr.bf16.mxu0 %v1132
  %1218 = vmatpush1.bf16.msra.mxu0 %v1131
  %1219 = vmatprep.subr.bf16.mxu0 0
  %1220 = vmatpush1.bf16.msra.mxu0 0
  %1221 = vmatprep.subr.bf16.mxu0 0
  %1222 = vmatpush1.bf16.msra.mxu0 0
  %1223 = vmatprep.subr.bf16.mxu0 0
  %1224 = vmatpush1.bf16.msra.mxu0 0
  %1225 = vmatprep.subr.bf16.mxu0 0
  %1226 = vmatpush1.bf16.msra.mxu0 0
  %1227 = vmatprep.subr.bf16.mxu0 0
  %1228 = vmatpush1.bf16.msra.mxu0 0
  %1229 = vmatprep.subr.bf16.mxu0 0
  %1230 = vmatpush1.bf16.msra.mxu0 0
  %1231 = vmatprep.subr.bf16.mxu0 0
  %1232 = vmatpush1.bf16.msra.mxu0 0
  %1233 = vmatprep.subr.bf16.mxu0 0
  %1234 = vmatpush1.bf16.msra.mxu0 0
  %1235 = vmatprep.subr.bf16.mxu0 0
  %1236 = vmatpush1.bf16.msra.mxu0 0
  %1237 = vmatprep.subr.bf16.mxu0 0
  %1238 = vmatpush1.bf16.msra.mxu0 0
  %1239 = vmatprep.subr.bf16.mxu0 0
  %1240 = vmatpush1.bf16.msra.mxu0 0
  %1241 = vmatprep.subr.bf16.mxu0 0
  %1242 = vmatpush1.bf16.msra.mxu0 0
  %1243 = vmatprep.subr.bf16.mxu0 0
  %1244 = vmatpush1.bf16.msra.mxu0 0
  %1245 = vmatprep.subr.bf16.mxu0 0
  %1246 = vmatpush1.bf16.msra.mxu0 0
  %1247 = vmatprep.mubr.bf16.mxu0 0
  %1248 = vmatmul.mubr.bf16.gmra.mrb[0].mxu0 %v1157
  %v1249 = vpop.f32.mrb[0].mxu0
  %v1250 = vadd.f32 %v1197, %v1249
  %v1251 = vpop.f32.mrb[0].mxu0
  %v1252 = vadd.f32 %v1199, %v1251
  %v1253 = vpop.f32.mrb[0].mxu0
  %v1254 = vadd.f32 %v1201, %v1253
  %v1255 = vpop.f32.mrb[0].mxu0
  %v1256 = vadd.f32 %v1203, %v1255
  %1257 = vmatprep.mubr.bf16.mxu0 0
  %1258 = vmatmul.mubr.bf16.gmra.mrb[0].mxu0 %v1160
  %v1259 = vpop.f32.mrb[0].mxu0
  %v1260 = vadd.f32 %v1207, %v1259
  %v1261 = vpop.f32.mrb[0].mxu0
  %v1262 = vadd.f32 %v1209, %v1261
  %v1263 = vpop.f32.mrb[0].mxu0
  %v1264 = vadd.f32 %v1211, %v1263
  %v1265 = vpop.f32.mrb[0].mxu0
  %v1266 = vadd.f32 %v1213, %v1265
  %1267 = vdwg.mxu0
  %v1276 = vunpack.c.l.b16 %v949
  %v1277 = vunpack.c.h.b16 %v949
  %v1278 = vunpack.c.l.b16 %v950
  %v1279 = vunpack.c.l.b16 %v951
  %v1280 = vunpack.c.h.b16 %v951
  %v1281 = vunpack.c.l.b16 %v952
  %v1282 = vunpack.c.l.b16 %v955
  %v1283 = vunpack.c.h.b16 %v955
  %v1284 = vunpack.c.l.b16 %v956
  %v1285 = vunpack.c.l.b16 %v957
  %v1286 = vunpack.c.h.b16 %v957
  %v1287 = vunpack.c.l.b16 %v958
  %v1288 = vpack.c.b16 %v1279, %v1276
  %v1289 = vpack.c.b16 %v1280, %v1277
  %v1290 = vpack.c.b16 %v1281, %v1278
  %v1291 = vpack.c.b16 %v1285, %v1282
  %v1292 = vpack.c.b16 %v1286, %v1283
  %v1293 = vpack.c.b16 %v1287, %v1284
  %v1299 = vsel %vm1155, %v1290, 0
  %v1302 = vsel %vm1155, %v1293, 0
  %1304 = vmatprep.subr.bf16.mxu0 %v962
  %1305 = vmatpush1.bf16.msra.mxu0 %v961
  %1306 = vmatprep.subr.bf16.mxu0 %v964
  %1307 = vmatpush1.bf16.msra.mxu0 %v963
  %1308 = vmatprep.subr.bf16.mxu0 %v966
  %1309 = vmatpush1.bf16.msra.mxu0 %v965
  %1310 = vmatprep.subr.bf16.mxu0 %v968
  %1311 = vmatpush1.bf16.msra.mxu0 %v967
  %1312 = vmatprep.subr.bf16.mxu0 %v970
  %1313 = vmatpush1.bf16.msra.mxu0 %v969
  %1314 = vmatprep.subr.bf16.mxu0 %v972
  %1315 = vmatpush1.bf16.msra.mxu0 %v971
  %1316 = vmatprep.subr.bf16.mxu0 %v974
  %1317 = vmatpush1.bf16.msra.mxu0 %v973
  %1318 = vmatprep.subr.bf16.mxu0 %v976
  %1319 = vmatpush1.bf16.msra.mxu0 %v975
  %1320 = vmatprep.subr.bf16.mxu0 %v978
  %1321 = vmatpush1.bf16.msra.mxu0 %v977
  %1322 = vmatprep.subr.bf16.mxu0 %v980
  %1323 = vmatpush1.bf16.msra.mxu0 %v979
  %1324 = vmatprep.subr.bf16.mxu0 %v982
  %1325 = vmatpush1.bf16.msra.mxu0 %v981
  %1326 = vmatprep.subr.bf16.mxu0 %v984
  %1327 = vmatpush1.bf16.msra.mxu0 %v983
  %1328 = vmatprep.subr.bf16.mxu0 %v986
  %1329 = vmatpush1.bf16.msra.mxu0 %v985
  %1330 = vmatprep.subr.bf16.mxu0 %v988
  %1331 = vmatpush1.bf16.msra.mxu0 %v987
  %1332 = vmatprep.subr.bf16.mxu0 %v990
  %1333 = vmatpush1.bf16.msra.mxu0 %v989
  %1334 = vmatprep.subr.bf16.mxu0 %v992
  %1335 = vmatpush1.bf16.msra.mxu0 %v991
  %1336 = vmatprep.mubr.bf16.mxu0 %v1289
  %1337 = vmatmul.mubr.bf16.gmra.mrb[0].mxu0 %v1288
  %v1338 = vpop.f32.mrb[0].mxu0
  %v1339 = vadd.f32 %v1250, %v1338
  %v1340 = vpop.f32.mrb[0].mxu0
  %v1341 = vadd.f32 %v1252, %v1340
  %v1342 = vpop.f32.mrb[0].mxu0
  %v1343 = vadd.f32 %v1254, %v1342
  %v1344 = vpop.f32.mrb[0].mxu0
  %v1345 = vadd.f32 %v1256, %v1344
  %1346 = vmatprep.mubr.bf16.mxu0 %v1292
  %1347 = vmatmul.mubr.bf16.gmra.mrb[0].mxu0 %v1291
  %v1348 = vpop.f32.mrb[0].mxu0
  %v1349 = vadd.f32 %v1260, %v1348
  %v1350 = vpop.f32.mrb[0].mxu0
  %v1351 = vadd.f32 %v1262, %v1350
  %v1352 = vpop.f32.mrb[0].mxu0
  %v1353 = vadd.f32 %v1264, %v1352
  %v1354 = vpop.f32.mrb[0].mxu0
  %v1355 = vadd.f32 %v1266, %v1354
  %1356 = vdwg.mxu0
  %1357 = vmatprep.subr.bf16.mxu0 %v994
  %1358 = vmatpush1.bf16.msra.mxu0 %v993
  %1359 = vmatprep.subr.bf16.mxu0 %v996
  %1360 = vmatpush1.bf16.msra.mxu0 %v995
  %1361 = vmatprep.subr.bf16.mxu0 0
  %1362 = vmatpush1.bf16.msra.mxu0 0
  %1363 = vmatprep.subr.bf16.mxu0 0
  %1364 = vmatpush1.bf16.msra.mxu0 0
  %1365 = vmatprep.subr.bf16.mxu0 0
  %1366 = vmatpush1.bf16.msra.mxu0 0
  %1367 = vmatprep.subr.bf16.mxu0 0
  %1368 = vmatpush1.bf16.msra.mxu0 0
  %1369 = vmatprep.subr.bf16.mxu0 0
  %1370 = vmatpush1.bf16.msra.mxu0 0
  %1371 = vmatprep.subr.bf16.mxu0 0
  %1372 = vmatpush1.bf16.msra.mxu0 0
  %1373 = vmatprep.subr.bf16.mxu0 0
  %1374 = vmatpush1.bf16.msra.mxu0 0
  %1375 = vmatprep.subr.bf16.mxu0 0
  %1376 = vmatpush1.bf16.msra.mxu0 0
  %1377 = vmatprep.subr.bf16.mxu0 0
  %1378 = vmatpush1.bf16.msra.mxu0 0
  %1379 = vmatprep.subr.bf16.mxu0 0
  %1380 = vmatpush1.bf16.msra.mxu0 0
  %1381 = vmatprep.subr.bf16.mxu0 0
  %1382 = vmatpush1.bf16.msra.mxu0 0
  %1383 = vmatprep.subr.bf16.mxu0 0
  %1384 = vmatpush1.bf16.msra.mxu0 0
  %1385 = vmatprep.subr.bf16.mxu0 0
  %1386 = vmatpush1.bf16.msra.mxu0 0
  %1387 = vmatprep.subr.bf16.mxu0 0
  %1388 = vmatpush1.bf16.msra.mxu0 0
  %1389 = vmatprep.mubr.bf16.mxu0 0
  %1390 = vmatmul.mubr.bf16.gmra.mrb[0].mxu0 %v1299
  %v1391 = vpop.f32.mrb[0].mxu0
  %v1392 = vadd.f32 %v1339, %v1391
  %v1393 = vpop.f32.mrb[0].mxu0
  %v1394 = vadd.f32 %v1341, %v1393
  %v1395 = vpop.f32.mrb[0].mxu0
  %v1396 = vadd.f32 %v1343, %v1395
  %v1397 = vpop.f32.mrb[0].mxu0
  %v1398 = vadd.f32 %v1345, %v1397
  %1399 = vmatprep.mubr.bf16.mxu0 0
  %1400 = vmatmul.mubr.bf16.gmra.mrb[0].mxu0 %v1302
  %v1401 = vpop.f32.mrb[0].mxu0
  %v1402 = vadd.f32 %v1349, %v1401
  %v1403 = vpop.f32.mrb[0].mxu0
  %v1404 = vadd.f32 %v1351, %v1403
  %v1405 = vpop.f32.mrb[0].mxu0
  %v1406 = vadd.f32 %v1353, %v1405
  %v1407 = vpop.f32.mrb[0].mxu0
  %v1408 = vadd.f32 %v1355, %v1407
  %1409 = vdwg.mxu0
  %vm1414 = vcmask 1042432
  %vm1415 = vcmask 1046532
  %vm1416 = vmor %vm1414, %vm1415
  %v1417 = vrot.slane %v949, 5
  %v1418 = vrot.slane %v1417, 4
  %v1419 = vrot.slane %v951, 5
  %v1420 = vsel %vm1416, %v1418, %v1419
  %v1421 = vrot.slane %v950, 5
  %v1422 = vrot.slane %v1421, 4
  %v1423 = vrot.slane %v952, 5
  %v1424 = vsel %vm1416, %v1422, %v1423
  %v1425 = vrot.slane %v1419, 4
  %v1426 = vrot.slane %v953, 5
  %v1427 = vsel %vm1416, %v1425, %v1426
  %v1428 = vrot.slane %v1423, 4
  %v1429 = vrot.slane %v954, 5
  %v1430 = vsel %vm1416, %v1428, %v1429
  %v1431 = vrot.slane %v955, 5
  %v1432 = vrot.slane %v1431, 4
  %v1433 = vrot.slane %v957, 5
  %v1434 = vsel %vm1416, %v1432, %v1433
  %v1435 = vrot.slane %v956, 5
  %v1436 = vrot.slane %v1435, 4
  %v1437 = vrot.slane %v958, 5
  %v1438 = vsel %vm1416, %v1436, %v1437
  %v1439 = vrot.slane %v1433, 4
  %v1440 = vrot.slane %v959, 5
  %v1441 = vsel %vm1416, %v1439, %v1440
  %v1442 = vrot.slane %v1437, 4
  %v1443 = vrot.slane %v960, 5
  %v1444 = vsel %vm1416, %v1442, %v1443
  %s1445 = scalar_lea.vmem [#allocation2], 576
  %v1446 = vld [vmem:[%s1445] sm:$0xff]
  %v1447 = vld [vmem:[%s1445 + $0x8] sm:$0xff]
  %v1448 = vld [vmem:[%s1445 + $0x10] sm:$0xff]
  %v1449 = vld [vmem:[%s1445 + $0x18] sm:$0xff]
  %v1450 = vld [vmem:[%s1445 + $0x20] sm:$0xff]
  %v1451 = vld [vmem:[%s1445 + $0x28] sm:$0xff]
  %v1452 = vld [vmem:[%s1445 + $0x30] sm:$0xff]
  %v1453 = vld [vmem:[%s1445 + $0x38] sm:$0xff]
  %v1454 = vld [vmem:[%s1445 + $0x40] sm:$0xff]
  %v1455 = vld [vmem:[%s1445 + $0x48] sm:$0xff]
  %v1456 = vld [vmem:[%s1445 + $0x50] sm:$0xff]
  %v1457 = vld [vmem:[%s1445 + $0x58] sm:$0xff]
  %v1458 = vld [vmem:[%s1445 + $0x60] sm:$0xff]
  %v1459 = vld [vmem:[%s1445 + $0x68] sm:$0xff]
  %v1460 = vld [vmem:[%s1445 + $0x70] sm:$0xff]
  %v1461 = vld [vmem:[%s1445 + $0x78] sm:$0xff]
  %v1462 = vld [vmem:[%s1445 + $0x80] sm:$0xff]
  %v1463 = vld [vmem:[%s1445 + $0x88] sm:$0xff]
  %v1464 = vld [vmem:[%s1445 + $0x90] sm:$0xff]
  %v1465 = vld [vmem:[%s1445 + $0x98] sm:$0xff]
  %v1466 = vld [vmem:[%s1445 + $0xa0] sm:$0xff]
  %v1467 = vld [vmem:[%s1445 + $0xa8] sm:$0xff]
  %v1468 = vld [vmem:[%s1445 + $0xb0] sm:$0xff]
  %v1469 = vld [vmem:[%s1445 + $0xb8] sm:$0xff]
  %v1470 = vld [vmem:[%s1445 + $0xc0] sm:$0xff]
  %v1471 = vld [vmem:[%s1445 + $0xc8] sm:$0xff]
  %v1472 = vld [vmem:[%s1445 + $0xd0] sm:$0xff]
  %v1473 = vld [vmem:[%s1445 + $0xd8] sm:$0xff]
  %v1474 = vld [vmem:[%s1445 + $0xe0] sm:$0xff]
  %v1475 = vld [vmem:[%s1445 + $0xe8] sm:$0xff]
  %v1476 = vld [vmem:[%s1445 + $0xf0] sm:$0xff]
  %v1477 = vld [vmem:[%s1445 + $0xf8] sm:$0xff]
  %v1478 = vld [vmem:[%s1445 + $0x100] sm:$0xff]
  %v1479 = vld [vmem:[%s1445 + $0x108] sm:$0xff]
  %v1480 = vld [vmem:[%s1445 + $0x110] sm:$0xff]
  %v1481 = vld [vmem:[%s1445 + $0x118] sm:$0xff]
  %v1482 = vunpack.c.l.b16 %v1420
  %v1483 = vunpack.c.h.b16 %v1420
  %v1484 = vunpack.c.l.b16 %v1424
  %v1485 = vunpack.c.l.b16 %v1427
  %v1486 = vunpack.c.h.b16 %v1427
  %v1487 = vunpack.c.l.b16 %v1430
  %v1488 = vunpack.c.l.b16 %v1434
  %v1489 = vunpack.c.h.b16 %v1434
  %v1490 = vunpack.c.l.b16 %v1438
  %v1491 = vunpack.c.l.b16 %v1441
  %v1492 = vunpack.c.h.b16 %v1441
  %v1493 = vunpack.c.l.b16 %v1444
  %v1494 = vpack.c.b16 %v1485, %v1482
  %v1495 = vpack.c.b16 %v1486, %v1483
  %v1496 = vpack.c.b16 %v1487, %v1484
  %v1497 = vpack.c.b16 %v1491, %v1488
  %v1498 = vpack.c.b16 %v1492, %v1489
  %v1499 = vpack.c.b16 %v1493, %v1490
  %v1505 = vsel %vm1155, %v1496, 0
  %v1508 = vsel %vm1155, %v1499, 0
  %1510 = vmatprep.subr.bf16.mxu0 %v1447
  %1511 = vmatpush1.bf16.msra.mxu0 %v1446
  %1512 = vmatprep.subr.bf16.mxu0 %v1449
  %1513 = vmatpush1.bf16.msra.mxu0 %v1448
  %1514 = vmatprep.subr.bf16.mxu0 %v1451
  %1515 = vmatpush1.bf16.msra.mxu0 %v1450
  %1516 = vmatprep.subr.bf16.mxu0 %v1453
  %1517 = vmatpush1.bf16.msra.mxu0 %v1452
  %1518 = vmatprep.subr.bf16.mxu0 %v1455
  %1519 = vmatpush1.bf16.msra.mxu0 %v1454
  %1520 = vmatprep.subr.bf16.mxu0 %v1457
  %1521 = vmatpush1.bf16.msra.mxu0 %v1456
  %1522 = vmatprep.subr.bf16.mxu0 %v1459
  %1523 = vmatpush1.bf16.msra.mxu0 %v1458
  %1524 = vmatprep.subr.bf16.mxu0 %v1461
  %1525 = vmatpush1.bf16.msra.mxu0 %v1460
  %1526 = vmatprep.subr.bf16.mxu0 %v1463
  %1527 = vmatpush1.bf16.msra.mxu0 %v1462
  %1528 = vmatprep.subr.bf16.mxu0 %v1465
  %1529 = vmatpush1.bf16.msra.mxu0 %v1464
  %1530 = vmatprep.subr.bf16.mxu0 %v1467
  %1531 = vmatpush1.bf16.msra.mxu0 %v1466
  %1532 = vmatprep.subr.bf16.mxu0 %v1469
  %1533 = vmatpush1.bf16.msra.mxu0 %v1468
  %1534 = vmatprep.subr.bf16.mxu0 %v1471
  %1535 = vmatpush1.bf16.msra.mxu0 %v1470
  %1536 = vmatprep.subr.bf16.mxu0 %v1473
  %1537 = vmatpush1.bf16.msra.mxu0 %v1472
  %1538 = vmatprep.subr.bf16.mxu0 %v1475
  %1539 = vmatpush1.bf16.msra.mxu0 %v1474
  %1540 = vmatprep.subr.bf16.mxu0 %v1477
  %1541 = vmatpush1.bf16.msra.mxu0 %v1476
  %1542 = vmatprep.mubr.bf16.mxu0 %v1495
  %1543 = vmatmul.mubr.bf16.gmra.mrb[0].mxu0 %v1494
  %v1544 = vpop.f32.mrb[0].mxu0
  %v1545 = vadd.f32 0.0, %v1544
  %v1546 = vpop.f32.mrb[0].mxu0
  %v1547 = vadd.f32 0.0, %v1546
  %v1548 = vpop.f32.mrb[0].mxu0
  %v1549 = vadd.f32 0.0, %v1548
  %v1550 = vpop.f32.mrb[0].mxu0
  %v1551 = vadd.f32 0.0, %v1550
  %1552 = vmatprep.mubr.bf16.mxu0 %v1498
  %1553 = vmatmul.mubr.bf16.gmra.mrb[0].mxu0 %v1497
  %v1554 = vpop.f32.mrb[0].mxu0
  %v1555 = vadd.f32 0.0, %v1554
  %v1556 = vpop.f32.mrb[0].mxu0
  %v1557 = vadd.f32 0.0, %v1556
  %v1558 = vpop.f32.mrb[0].mxu0
  %v1559 = vadd.f32 0.0, %v1558
  %v1560 = vpop.f32.mrb[0].mxu0
  %v1561 = vadd.f32 0.0, %v1560
  %1562 = vdwg.mxu0
  %1563 = vmatprep.subr.bf16.mxu0 %v1479
  %1564 = vmatpush1.bf16.msra.mxu0 %v1478
  %1565 = vmatprep.subr.bf16.mxu0 %v1481
  %1566 = vmatpush1.bf16.msra.mxu0 %v1480
  %1567 = vmatprep.subr.bf16.mxu0 0
  %1568 = vmatpush1.bf16.msra.mxu0 0
  %1569 = vmatprep.subr.bf16.mxu0 0
  %1570 = vmatpush1.bf16.msra.mxu0 0
  %1571 = vmatprep.subr.bf16.mxu0 0
  %1572 = vmatpush1.bf16.msra.mxu0 0
  %1573 = vmatprep.subr.bf16.mxu0 0
  %1574 = vmatpush1.bf16.msra.mxu0 0
  %1575 = vmatprep.subr.bf16.mxu0 0
  %1576 = vmatpush1.bf16.msra.mxu0 0
  %1577 = vmatprep.subr.bf16.mxu0 0
  %1578 = vmatpush1.bf16.msra.mxu0 0
  %1579 = vmatprep.subr.bf16.mxu0 0
  %1580 = vmatpush1.bf16.msra.mxu0 0
  %1581 = vmatprep.subr.bf16.mxu0 0
  %1582 = vmatpush1.bf16.msra.mxu0 0
  %1583 = vmatprep.subr.bf16.mxu0 0
  %1584 = vmatpush1.bf16.msra.mxu0 0
  %1585 = vmatprep.subr.bf16.mxu0 0
  %1586 = vmatpush1.bf16.msra.mxu0 0
  %1587 = vmatprep.subr.bf16.mxu0 0
  %1588 = vmatpush1.bf16.msra.mxu0 0
  %1589 = vmatprep.subr.bf16.mxu0 0
  %1590 = vmatpush1.bf16.msra.mxu0 0
  %1591 = vmatprep.subr.bf16.mxu0 0
  %1592 = vmatpush1.bf16.msra.mxu0 0
  %1593 = vmatprep.subr.bf16.mxu0 0
  %1594 = vmatpush1.bf16.msra.mxu0 0
  %1595 = vmatprep.mubr.bf16.mxu0 0
  %1596 = vmatmul.mubr.bf16.gmra.mrb[0].mxu0 %v1505
  %v1597 = vpop.f32.mrb[0].mxu0
  %v1598 = vadd.f32 %v1545, %v1597
  %v1599 = vpop.f32.mrb[0].mxu0
  %v1600 = vadd.f32 %v1547, %v1599
  %v1601 = vpop.f32.mrb[0].mxu0
  %v1602 = vadd.f32 %v1549, %v1601
  %v1603 = vpop.f32.mrb[0].mxu0
  %v1604 = vadd.f32 %v1551, %v1603
  %1605 = vmatprep.mubr.bf16.mxu0 0
  %1606 = vmatmul.mubr.bf16.gmra.mrb[0].mxu0 %v1508
  %v1607 = vpop.f32.mrb[0].mxu0
  %v1608 = vadd.f32 %v1555, %v1607
  %v1609 = vpop.f32.mrb[0].mxu0
  %v1610 = vadd.f32 %v1557, %v1609
  %v1611 = vpop.f32.mrb[0].mxu0
  %v1612 = vadd.f32 %v1559, %v1611
  %v1613 = vpop.f32.mrb[0].mxu0
  %v1614 = vadd.f32 %v1561, %v1613
  %1615 = vdwg.mxu0
  %v1616 = vadd.f32 %v1392, %v1598
  %v1617 = vadd.f32 %v1394, %v1600
  %v1618 = vadd.f32 %v1396, %v1602
  %v1619 = vadd.f32 %v1398, %v1604
  %v1620 = vadd.f32 %v1402, %v1608
  %v1621 = vadd.f32 %v1404, %v1610
  %v1622 = vadd.f32 %v1406, %v1612
  %v1623 = vadd.f32 %v1408, %v1614
  %v1624 = vld [vmem:[#allocation3] sm:$0x3]
  %v1625 = vadd.f32 %v1616, %v1618
  %v1626 = vadd.f32 %v1625, %v1620
  %v1627 = vadd.f32 %v1626, %v1622
  %v1628 = vrot.slane %v1627, 4
  %v1629 = vadd.f32 %v1627, %v1628
  %v1630 = vrot.slane %v1629, 2
  %v1631 = vadd.f32 %v1629, %v1630
  %v1632 = vrot.slane %v1631, 1
  %v1633 = vadd.f32 %v1631, %v1632
  %v1634 = vadd.f32 %v1617, %v1619
  %v1635 = vadd.f32 %v1634, %v1621
  %v1636 = vadd.f32 %v1635, %v1623
  %v1637 = vrot.slane %v1636, 4
  %v1638 = vadd.f32 %v1636, %v1637
  %v1639 = vrot.slane %v1638, 2
  %v1640 = vadd.f32 %v1638, %v1639
  %v1641 = vrot.slane %v1640, 1
  %v1642 = vadd.f32 %v1640, %v1641
  %v1645 = vcombine.low %v1633, %v1642
  %v1647 = vunpack.c.l.s4 1966171168
  %v1648 = vunpack.c.0.s8 %v1647
  %v1649 = vlaneseq
  %v1650 = vshrl.u32 %v1649, 7
  %v1651 = vsub.s32 %v1648, %v1650
  %v1652 = vrot.slane %v1645, %v1651
  %v1654 = vunpack.c.l.s4 1966171168
  %v1655 = vunpack.c.0.s8 %v1654
  %v1656 = vlaneseq
  %v1657 = vshrl.u32 %v1656, 7
  %v1658 = vsub.s32 %v1655, %v1657
  %v1659 = vrot.slane %v1652, %v1658
  %v1661 = vadd.f32 %v1624, %v1659
  %v1662 = vlaneseq
  %vm1663 = vcmp.ge.s32.totalorder %v1662, 0
  %vm1664 = vcmp.lt.s32.totalorder %v1662, 256
  %vm1665 = vmand %vm1663, %vm1664
  %1666 = vst.msk [vmem:[#allocation3] sm:$0x3] %vm1665, %v1661
  %v1667 = vld [vmem:[#allocation4] sm:$0x3]
  %v1668 = vmul.f32 %v1616, %v1616
  %v1669 = vmul.f32 %v1617, %v1617
  %v1670 = vmul.f32 %v1618, %v1618
  %v1671 = vmul.f32 %v1619, %v1619
  %v1672 = vmul.f32 %v1620, %v1620
  %v1673 = vmul.f32 %v1621, %v1621
  %v1674 = vmul.f32 %v1622, %v1622
  %v1675 = vmul.f32 %v1623, %v1623
  %v1676 = vadd.f32 %v1668, %v1670
  %v1677 = vadd.f32 %v1676, %v1672
  %v1678 = vadd.f32 %v1677, %v1674
  %v1679 = vrot.slane %v1678, 4
  %v1680 = vadd.f32 %v1678, %v1679
  %v1681 = vrot.slane %v1680, 2
  %v1682 = vadd.f32 %v1680, %v1681
  %v1683 = vrot.slane %v1682, 1
  %v1684 = vadd.f32 %v1682, %v1683
  %v1685 = vadd.f32 %v1669, %v1671
  %v1686 = vadd.f32 %v1685, %v1673
  %v1687 = vadd.f32 %v1686, %v1675
  %v1688 = vrot.slane %v1687, 4
  %v1689 = vadd.f32 %v1687, %v1688
  %v1690 = vrot.slane %v1689, 2
  %v1691 = vadd.f32 %v1689, %v1690
  %v1692 = vrot.slane %v1691, 1
  %v1693 = vadd.f32 %v1691, %v1692
  %v1696 = vcombine.low %v1684, %v1693
  %v1698 = vunpack.c.l.s4 1966171168
  %v1699 = vunpack.c.0.s8 %v1698
  %v1700 = vlaneseq
  %v1701 = vshrl.u32 %v1700, 7
  %v1702 = vsub.s32 %v1699, %v1701
  %v1703 = vrot.slane %v1696, %v1702
  %v1705 = vunpack.c.l.s4 1966171168
  %v1706 = vunpack.c.0.s8 %v1705
  %v1707 = vlaneseq
  %v1708 = vshrl.u32 %v1707, 7
  %v1709 = vsub.s32 %v1706, %v1708
  %v1710 = vrot.slane %v1703, %v1709
  %v1712 = vadd.f32 %v1667, %v1710
  %1713 = vst.msk [vmem:[#allocation4] sm:$0x3] %vm1665, %v1712
  // Predicated region
  $region64: #{rot_conv2d_forward.1} parent=0 // pred_check
    %p1714 = pneg %p22
  $region65: #{rot_conv2d_forward.1} parent=0 // pred_check_branch
    %1716 = sbr.rel (%p1714) target = $region67
  $region66: #{rot_conv2d_forward.1} parent=0 // pred_region
    %v1717 = vld [vmem:[#allocation3] sm:$0x3]
    %v1718 = vld [vmem:[%s2] sm:$0xff]
    %v1719 = vld [vmem:[%s2 + $0x8] sm:$0xff]
    %v1720 = vld [vmem:[%s2 + $0x10] sm:$0xff]
    %v1721 = vld [vmem:[%s2 + $0x18] sm:$0xff]
    %v1722 = vld [vmem:[%s2 + $0x20] sm:$0xff]
    %v1723 = vld [vmem:[%s2 + $0x28] sm:$0xff]
    %v1724 = vld [vmem:[%s2 + $0x30] sm:$0xff]
    %v1725 = vld [vmem:[%s2 + $0x38] sm:$0xff]
    %v1726 = vld [vmem:[%s2 + $0x40] sm:$0xff]
    %v1727 = vld [vmem:[%s2 + $0x48] sm:$0xff]
    %v1728 = vld [vmem:[%s2 + $0x50] sm:$0xff]
    %v1729 = vld [vmem:[%s2 + $0x58] sm:$0xff]
    %v1730 = vld [vmem:[%s2 + $0x60] sm:$0xff]
    %v1731 = vld [vmem:[%s2 + $0x68] sm:$0xff]
    %v1732 = vld [vmem:[%s2 + $0x70] sm:$0xff]
    %v1733 = vld [vmem:[%s2 + $0x78] sm:$0xff]
    %v1734 = vld [vmem:[%s2 + $0x80] sm:$0xff]
    %v1735 = vld [vmem:[%s2 + $0x88] sm:$0xff]
    %v1736 = vld [vmem:[%s2 + $0x90] sm:$0xff]
    %v1737 = vld [vmem:[%s2 + $0x98] sm:$0xff]
    %v1738 = vld [vmem:[%s2 + $0xa0] sm:$0xff]
    %v1739 = vld [vmem:[%s2 + $0xa8] sm:$0xff]
    %v1740 = vld [vmem:[%s2 + $0xb0] sm:$0xff]
    %v1741 = vld [vmem:[%s2 + $0xb8] sm:$0xff]
    %v1742 = vld [vmem:[%s2 + $0xc0] sm:$0xff]
    %v1743 = vld [vmem:[%s2 + $0xc8] sm:$0xff]
    %v1744 = vld [vmem:[%s2 + $0xd0] sm:$0xff]
    %v1745 = vld [vmem:[%s2 + $0xd8] sm:$0xff]
    %v1746 = vld [vmem:[%s2 + $0xe0] sm:$0xff]
    %v1747 = vld [vmem:[%s2 + $0xe8] sm:$0xff]
    %v1748 = vld [vmem:[%s2 + $0xf0] sm:$0xff]
    %v1749 = vld [vmem:[%s2 + $0xf8] sm:$0xff]
    %v1751 = vlaneseq
    %v1752 = vshrl.u32 %v1751, 7
    %v1753 = vsub.s32 0, %v1752
    %v1754 = vrot.slane %v1717, %v1753
    %v1755 = vlaneseq
    %v1756 = vshrl.u32 %v1755, 7
    %v1757 = vsub.s32 1, %v1756
    %v1758 = vrot.slane %v1717, %v1757
    %1761 = vmatprep.subr.mxu0 0.0
    %1762 = vmatpush1.msra.mxu0 %v1718
    %1763 = vmatprep.subr.mxu0 0.0
    %1764 = vmatpush1.msra.mxu0 %v1719
    %1765 = vmatprep.subr.mxu0 0.0
    %1766 = vmatpush1.msra.mxu0 %v1720
    %1767 = vmatprep.subr.mxu0 0.0
    %1768 = vmatpush1.msra.mxu0 %v1721
    %1769 = vmatprep.subr.mxu0 0.0
    %1770 = vmatpush1.msra.mxu0 %v1722
    %1771 = vmatprep.subr.mxu0 0.0
    %1772 = vmatpush1.msra.mxu0 %v1723
    %1773 = vmatprep.subr.mxu0 0.0
    %1774 = vmatpush1.msra.mxu0 %v1724
    %1775 = vmatprep.subr.mxu0 0.0
    %1776 = vmatpush1.msra.mxu0 %v1725
    %1777 = vmatprep.subr.mxu0 0.0
    %1778 = vmatpush1.msra.mxu0 %v1726
    %1779 = vmatprep.subr.mxu0 0.0
    %1780 = vmatpush1.msra.mxu0 %v1727
    %1781 = vmatprep.subr.mxu0 0.0
    %1782 = vmatpush1.msra.mxu0 %v1728
    %1783 = vmatprep.subr.mxu0 0.0
    %1784 = vmatpush1.msra.mxu0 %v1729
    %1785 = vmatprep.subr.mxu0 0.0
    %1786 = vmatpush1.msra.mxu0 %v1730
    %1787 = vmatprep.subr.mxu0 0.0
    %1788 = vmatpush1.msra.mxu0 %v1731
    %1789 = vmatprep.subr.mxu0 0.0
    %1790 = vmatpush1.msra.mxu0 %v1732
    %1791 = vmatprep.subr.mxu0 0.0
    %1792 = vmatpush1.msra.mxu0 %v1733
    %1793 = vmatprep.subr.mxu0 0.0
    %1794 = vmatpush1.msra.mxu0 %v1734
    %1795 = vmatprep.subr.mxu0 0.0
    %1796 = vmatpush1.msra.mxu0 %v1735
    %1797 = vmatprep.subr.mxu0 0.0
    %1798 = vmatpush1.msra.mxu0 %v1736
    %1799 = vmatprep.subr.mxu0 0.0
    %1800 = vmatpush1.msra.mxu0 %v1737
    %1801 = vmatprep.subr.mxu0 0.0
    %1802 = vmatpush1.msra.mxu0 %v1738
    %1803 = vmatprep.subr.mxu0 0.0
    %1804 = vmatpush1.msra.mxu0 %v1739
    %1805 = vmatprep.subr.mxu0 0.0
    %1806 = vmatpush1.msra.mxu0 %v1740
    %1807 = vmatprep.subr.mxu0 0.0
    %1808 = vmatpush1.msra.mxu0 %v1741
    %1809 = vmatprep.subr.mxu0 0.0
    %1810 = vmatpush1.msra.mxu0 %v1742
    %1811 = vmatprep.subr.mxu0 0.0
    %1812 = vmatpush1.msra.mxu0 %v1743
    %1813 = vmatprep.subr.mxu0 0.0
    %1814 = vmatpush1.msra.mxu0 %v1744
    %1815 = vmatprep.subr.mxu0 0.0
    %1816 = vmatpush1.msra.mxu0 %v1745
    %1817 = vmatprep.subr.mxu0 0.0
    %1818 = vmatpush1.msra.mxu0 %v1746
    %1819 = vmatprep.subr.mxu0 0.0
    %1820 = vmatpush1.msra.mxu0 %v1747
    %1821 = vmatprep.subr.mxu0 0.0
    %1822 = vmatpush1.msra.mxu0 %v1748
    %1823 = vmatprep.subr.mxu0 0.0
    %1824 = vmatpush1.msra.mxu0 %v1749
    %1825 = vmatprep.mubr.f32.mxu0 %v1758
    %1826 = vmatmul.mubr.f32.gmra.mrb[0].mxu0 %v1754
    %v1827 = vpop.f32.mrb[0].mxu0
    %v1828 = vadd.f32 0.0, %v1827
    %v1829 = vpop.f32.mrb[0].mxu0
    %1830 = vdwg.mxu0
    %v1831 = vld [vmem:[#allocation4] sm:$0x3]
    %v1833 = vlaneseq
    %v1834 = vshrl.u32 %v1833, 7
    %v1835 = vsub.s32 0, %v1834
    %v1836 = vrot.slane %v1831, %v1835
    %v1837 = vlaneseq
    %v1838 = vshrl.u32 %v1837, 7
    %v1839 = vsub.s32 1, %v1838
    %v1840 = vrot.slane %v1831, %v1839
    %1843 = vmatprep.subr.mxu0 0.0
    %1844 = vmatpush1.msra.mxu0 %v1718
    %1845 = vmatprep.subr.mxu0 0.0
    %1846 = vmatpush1.msra.mxu0 %v1719
    %1847 = vmatprep.subr.mxu0 0.0
    %1848 = vmatpush1.msra.mxu0 %v1720
    %1849 = vmatprep.subr.mxu0 0.0
    %1850 = vmatpush1.msra.mxu0 %v1721
    %1851 = vmatprep.subr.mxu0 0.0
    %1852 = vmatpush1.msra.mxu0 %v1722
    %1853 = vmatprep.subr.mxu0 0.0
    %1854 = vmatpush1.msra.mxu0 %v1723
    %1855 = vmatprep.subr.mxu0 0.0
    %1856 = vmatpush1.msra.mxu0 %v1724
    %1857 = vmatprep.subr.mxu0 0.0
    %1858 = vmatpush1.msra.mxu0 %v1725
    %1859 = vmatprep.subr.mxu0 0.0
    %1860 = vmatpush1.msra.mxu0 %v1726
    %1861 = vmatprep.subr.mxu0 0.0
    %1862 = vmatpush1.msra.mxu0 %v1727
    %1863 = vmatprep.subr.mxu0 0.0
    %1864 = vmatpush1.msra.mxu0 %v1728
    %1865 = vmatprep.subr.mxu0 0.0
    %1866 = vmatpush1.msra.mxu0 %v1729
    %1867 = vmatprep.subr.mxu0 0.0
    %1868 = vmatpush1.msra.mxu0 %v1730
    %1869 = vmatprep.subr.mxu0 0.0
    %1870 = vmatpush1.msra.mxu0 %v1731
    %1871 = vmatprep.subr.mxu0 0.0
    %1872 = vmatpush1.msra.mxu0 %v1732
    %1873 = vmatprep.subr.mxu0 0.0
    %1874 = vmatpush1.msra.mxu0 %v1733
    %1875 = vmatprep.subr.mxu0 0.0
    %1876 = vmatpush1.msra.mxu0 %v1734
    %1877 = vmatprep.subr.mxu0 0.0
    %1878 = vmatpush1.msra.mxu0 %v1735
    %1879 = vmatprep.subr.mxu0 0.0
    %1880 = vmatpush1.msra.mxu0 %v1736
    %1881 = vmatprep.subr.mxu0 0.0
    %1882 = vmatpush1.msra.mxu0 %v1737
    %1883 = vmatprep.subr.mxu0 0.0
    %1884 = vmatpush1.msra.mxu0 %v1738
    %1885 = vmatprep.subr.mxu0 0.0
    %1886 = vmatpush1.msra.mxu0 %v1739
    %1887 = vmatprep.subr.mxu0 0.0
    %1888 = vmatpush1.msra.mxu0 %v1740
    %1889 = vmatprep.subr.mxu0 0.0
    %1890 = vmatpush1.msra.mxu0 %v1741
    %1891 = vmatprep.subr.mxu0 0.0
    %1892 = vmatpush1.msra.mxu0 %v1742
    %1893 = vmatprep.subr.mxu0 0.0
    %1894 = vmatpush1.msra.mxu0 %v1743
    %1895 = vmatprep.subr.mxu0 0.0
    %1896 = vmatpush1.msra.mxu0 %v1744
    %1897 = vmatprep.subr.mxu0 0.0
    %1898 = vmatpush1.msra.mxu0 %v1745
    %1899 = vmatprep.subr.mxu0 0.0
    %1900 = vmatpush1.msra.mxu0 %v1746
    %1901 = vmatprep.subr.mxu0 0.0
    %1902 = vmatpush1.msra.mxu0 %v1747
    %1903 = vmatprep.subr.mxu0 0.0
    %1904 = vmatpush1.msra.mxu0 %v1748
    %1905 = vmatprep.subr.mxu0 0.0
    %1906 = vmatpush1.msra.mxu0 %v1749
    %1907 = vmatprep.mubr.f32.mxu0 %v1840
    %1908 = vmatmul.mubr.f32.gmra.mrb[0].mxu0 %v1836
    %v1909 = vpop.f32.mrb[0].mxu0
    %v1910 = vadd.f32 0.0, %v1909
    %v1911 = vpop.f32.mrb[0].mxu0
    %1912 = vdwg.mxu0
    %v1913 = vmul.f32 %v1828, 0.00048828125
    %v1914 = vmul.f32 %v1910, 0.00048828125
    %v1915 = vmul.f32 %v1913, %v1913
    %v1916 = vsub.f32 %v1914, %v1915
    %v1917 = vadd.f32 %v1916, 1e-05
    %v1918 = vrsqrt.pop %v1917
    %v1919 = vld [vmem:[%s4] sm:$0x1]
    %v1920 = vmul.f32 %v1919, %v1918
    %v1921 = vld [vmem:[%s5] sm:$0x1]
    %v1922 = vmul.f32 %v1913, %v1920
    %v1923 = vsub.f32 %v1921, %v1922
    %v1924 = vld [vmem:[%s3] sm:$0xff]
    %v1926 = vcombine.high %v1924, %v1924
    %vm1927 = vcmask 31744
    %v1929 = vsel %vm1927, %v1920, 0
    %vm1931 = vcmask 1043456
    %v1932 = vsel %vm1931, %v1924, 0
    %v1934 = vsel %vm1931, %v1926, 0
    %1936 = vmatprep.subr.mxu0 %v1934
    %1937 = vmatpush1.msra.mxu0 %v1932
    %1938 = vmatprep.subr.mxu0 0.0
    %1939 = vmatpush1.msra.mxu0 0.0
    %1940 = vmatprep.subr.mxu0 0.0
    %1941 = vmatpush1.msra.mxu0 0.0
    %1942 = vmatprep.subr.mxu0 0.0
    %1943 = vmatpush1.msra.mxu0 0.0
    %1944 = vmatprep.subr.mxu0 0.0
    %1945 = vmatpush1.msra.mxu0 0.0
    %1946 = vmatprep.subr.mxu0 0.0
    %1947 = vmatpush1.msra.mxu0 0.0
    %1948 = vmatprep.subr.mxu0 0.0
    %1949 = vmatpush1.msra.mxu0 0.0
    %1950 = vmatprep.subr.mxu0 0.0
    %1951 = vmatpush1.msra.mxu0 0.0
    %1952 = vmatprep.subr.mxu0 0.0
    %1953 = vmatpush1.msra.mxu0 0.0
    %1954 = vmatprep.subr.mxu0 0.0
    %1955 = vmatpush1.msra.mxu0 0.0
    %1956 = vmatprep.subr.mxu0 0.0
    %1957 = vmatpush1.msra.mxu0 0.0
    %1958 = vmatprep.subr.mxu0 0.0
    %1959 = vmatpush1.msra.mxu0 0.0
    %1960 = vmatprep.subr.mxu0 0.0
    %1961 = vmatpush1.msra.mxu0 0.0
    %1962 = vmatprep.subr.mxu0 0.0
    %1963 = vmatpush1.msra.mxu0 0.0
    %1964 = vmatprep.subr.mxu0 0.0
    %1965 = vmatpush1.msra.mxu0 0.0
    %1966 = vmatprep.subr.mxu0 0.0
    %1967 = vmatpush1.msra.mxu0 0.0
    %1968 = vmatprep.subr.mxu0 0.0
    %1969 = vmatpush1.msra.mxu0 0.0
    %1970 = vmatprep.subr.mxu0 0.0
    %1971 = vmatpush1.msra.mxu0 0.0
    %1972 = vmatprep.subr.mxu0 0.0
    %1973 = vmatpush1.msra.mxu0 0.0
    %1974 = vmatprep.subr.mxu0 0.0
    %1975 = vmatpush1.msra.mxu0 0.0
    %1976 = vmatprep.subr.mxu0 0.0
    %1977 = vmatpush1.msra.mxu0 0.0
    %1978 = vmatprep.subr.mxu0 0.0
    %1979 = vmatpush1.msra.mxu0 0.0
    %1980 = vmatprep.subr.mxu0 0.0
    %1981 = vmatpush1.msra.mxu0 0.0
    %1982 = vmatprep.subr.mxu0 0.0
    %1983 = vmatpush1.msra.mxu0 0.0
    %1984 = vmatprep.subr.mxu0 0.0
    %1985 = vmatpush1.msra.mxu0 0.0
    %1986 = vmatprep.subr.mxu0 0.0
    %1987 = vmatpush1.msra.mxu0 0.0
    %1988 = vmatprep.subr.mxu0 0.0
    %1989 = vmatpush1.msra.mxu0 0.0
    %1990 = vmatprep.subr.mxu0 0.0
    %1991 = vmatpush1.msra.mxu0 0.0
    %1992 = vmatprep.subr.mxu0 0.0
    %1993 = vmatpush1.msra.mxu0 0.0
    %1994 = vmatprep.subr.mxu0 0.0
    %1995 = vmatpush1.msra.mxu0 0.0
    %1996 = vmatprep.subr.mxu0 0.0
    %1997 = vmatpush1.msra.mxu0 0.0
    %1998 = vmatprep.subr.mxu0 0.0
    %1999 = vmatpush1.msra.mxu0 0.0
    %2000 = vmatprep.mubr.f32.mxu0 0.0
    %2001 = vmatmul.mubr.f32.gmra.mrb[0].mxu0 %v1929
    %v2002 = vpop.f32.mrb[0].mxu0
    %v2003 = vadd.f32 0.0, %v2002
    %v2004 = vpop.f32.mrb[0].mxu0
    %v2005 = vadd.f32 0.0, %v2004
    %2006 = vdwg.mxu0
    %v2008 = vsel %vm1927, %v1923, 0
    %2010 = vmatprep.subr.mxu0 %v1934
    %2011 = vmatpush1.msra.mxu0 %v1932
    %2012 = vmatprep.subr.mxu0 0.0
    %2013 = vmatpush1.msra.mxu0 0.0
    %2014 = vmatprep.subr.mxu0 0.0
    %2015 = vmatpush1.msra.mxu0 0.0
    %2016 = vmatprep.subr.mxu0 0.0
    %2017 = vmatpush1.msra.mxu0 0.0
    %2018 = vmatprep.subr.mxu0 0.0
    %2019 = vmatpush1.msra.mxu0 0.0
    %2020 = vmatprep.subr.mxu0 0.0
    %2021 = vmatpush1.msra.mxu0 0.0
    %2022 = vmatprep.subr.mxu0 0.0
    %2023 = vmatpush1.msra.mxu0 0.0
    %2024 = vmatprep.subr.mxu0 0.0
    %2025 = vmatpush1.msra.mxu0 0.0
    %2026 = vmatprep.subr.mxu0 0.0
    %2027 = vmatpush1.msra.mxu0 0.0
    %2028 = vmatprep.subr.mxu0 0.0
    %2029 = vmatpush1.msra.mxu0 0.0
    %2030 = vmatprep.subr.mxu0 0.0
    %2031 = vmatpush1.msra.mxu0 0.0
    %2032 = vmatprep.subr.mxu0 0.0
    %2033 = vmatpush1.msra.mxu0 0.0
    %2034 = vmatprep.subr.mxu0 0.0
    %2035 = vmatpush1.msra.mxu0 0.0
    %2036 = vmatprep.subr.mxu0 0.0
    %2037 = vmatpush1.msra.mxu0 0.0
    %2038 = vmatprep.subr.mxu0 0.0
    %2039 = vmatpush1.msra.mxu0 0.0
    %2040 = vmatprep.subr.mxu0 0.0
    %2041 = vmatpush1.msra.mxu0 0.0
    %2042 = vmatprep.subr.mxu0 0.0
    %2043 = vmatpush1.msra.mxu0 0.0
    %2044 = vmatprep.subr.mxu0 0.0
    %2045 = vmatpush1.msra.mxu0 0.0
    %2046 = vmatprep.subr.mxu0 0.0
    %2047 = vmatpush1.msra.mxu0 0.0
    %2048 = vmatprep.subr.mxu0 0.0
    %2049 = vmatpush1.msra.mxu0 0.0
    %2050 = vmatprep.subr.mxu0 0.0
    %2051 = vmatpush1.msra.mxu0 0.0
    %2052 = vmatprep.subr.mxu0 0.0
    %2053 = vmatpush1.msra.mxu0 0.0
    %2054 = vmatprep.subr.mxu0 0.0
    %2055 = vmatpush1.msra.mxu0 0.0
    %2056 = vmatprep.subr.mxu0 0.0
    %2057 = vmatpush1.msra.mxu0 0.0
    %2058 = vmatprep.subr.mxu0 0.0
    %2059 = vmatpush1.msra.mxu0 0.0
    %2060 = vmatprep.subr.mxu0 0.0
    %2061 = vmatpush1.msra.mxu0 0.0
    %2062 = vmatprep.subr.mxu0 0.0
    %2063 = vmatpush1.msra.mxu0 0.0
    %2064 = vmatprep.subr.mxu0 0.0
    %2065 = vmatpush1.msra.mxu0 0.0
    %2066 = vmatprep.subr.mxu0 0.0
    %2067 = vmatpush1.msra.mxu0 0.0
    %2068 = vmatprep.subr.mxu0 0.0
    %2069 = vmatpush1.msra.mxu0 0.0
    %2070 = vmatprep.subr.mxu0 0.0
    %2071 = vmatpush1.msra.mxu0 0.0
    %2072 = vmatprep.subr.mxu0 0.0
    %2073 = vmatpush1.msra.mxu0 0.0
    %2074 = vmatprep.mubr.f32.mxu0 0.0
    %2075 = vmatmul.mubr.f32.gmra.mrb[0].mxu0 %v2008
    %v2076 = vpop.f32.mrb[0].mxu0
    %v2077 = vadd.f32 0.0, %v2076
    %v2078 = vpop.f32.mrb[0].mxu0
    %v2079 = vadd.f32 0.0, %v2078
    %2080 = vdwg.mxu0
    %v2081 = vlaneseq
    %v2082 = vshrl.u32 %v2081, 7
    %v2083 = vsub.s32 0, %v2082
    %v2084 = vrot.slane %v2003, %v2083
    %v2085 = vlaneseq
    %v2086 = vshrl.u32 %v2085, 7
    %v2087 = vsub.s32 0, %v2086
    %v2088 = vrot.slane %v2005, %v2087
    %v2089 = vmul.f32 %v1616, %v2084
    %v2090 = vmul.f32 %v1617, %v2088
    %v2091 = vmul.f32 %v1618, %v2084
    %v2092 = vmul.f32 %v1619, %v2088
    %v2093 = vmul.f32 %v1620, %v2084
    %v2094 = vmul.f32 %v1621, %v2088
    %v2095 = vmul.f32 %v1622, %v2084
    %v2096 = vmul.f32 %v1623, %v2088
    %v2097 = vlaneseq
    %v2098 = vshrl.u32 %v2097, 7
    %v2099 = vsub.s32 0, %v2098
    %v2100 = vrot.slane %v2077, %v2099
    %v2101 = vlaneseq
    %v2102 = vshrl.u32 %v2101, 7
    %v2103 = vsub.s32 0, %v2102
    %v2104 = vrot.slane %v2079, %v2103
    %v2105 = vadd.f32 %v2089, %v2100
    %v2106 = vadd.f32 %v2090, %v2104
    %v2107 = vadd.f32 %v2091, %v2100
    %v2108 = vadd.f32 %v2092, %v2104
    %v2109 = vadd.f32 %v2093, %v2100
    %v2110 = vadd.f32 %v2094, %v2104
    %v2111 = vadd.f32 %v2095, %v2100
    %v2112 = vadd.f32 %v2096, %v2104
    %v2113 = vmax.f32 %v2105, 0.0
    %v2114 = vmax.f32 %v2106, 0.0
    %v2115 = vmax.f32 %v2107, 0.0
    %v2116 = vmax.f32 %v2108, 0.0
    %v2117 = vmax.f32 %v2109, 0.0
    %v2118 = vmax.f32 %v2110, 0.0
    %v2119 = vmax.f32 %v2111, 0.0
    %v2120 = vmax.f32 %v2112, 0.0
    %2121 = vst [vmem:[%s6] sm:$0xff] %v2113
    %2122 = vst [vmem:[%s6 + $0x8] sm:$0xff] %v2114
    %2123 = vst [vmem:[%s6 + $0x10] sm:$0xff] %v2115
    %2124 = vst [vmem:[%s6 + $0x18] sm:$0xff] %v2116
    %2125 = vst [vmem:[%s6 + $0x20] sm:$0xff] %v2117
    %2126 = vst [vmem:[%s6 + $0x28] sm:$0xff] %v2118
    %2127 = vst [vmem:[%s6 + $0x30] sm:$0xff] %v2119
    %2128 = vst [vmem:[%s6 + $0x38] sm:$0xff] %v2120
  $region67: #{rot_conv2d_forward.1} parent=0 // pred_fallthru
    _
  // Predicated region
  $region68: #{rot_conv2d_forward.1} parent=0 // pred_check
    _
  $region69: #{rot_conv2d_forward.1} parent=0 // pred_check_branch
    %2130 = sbr.rel (0) target = $region71
  $region70: #{rot_conv2d_forward.1} parent=0 // pred_region
    _
  $region71: #{rot_conv2d_forward.1} parent=0 // pred_fallthru
    _
  // Predicated region
  $region72: #{rot_conv2d_forward.1} parent=0 // pred_check
    _
  $region73: #{rot_conv2d_forward.1} parent=0 // pred_check_branch
    %2132 = sbr.rel (0) target = $region75
  $region74: #{rot_conv2d_forward.1} parent=0 // pred_region
    _
  $region75: #{rot_conv2d_forward.1} parent=0 // pred_fallthru
    _

</llo_original>
